<compile_context>
chip_gen: v6e
topology: v6e:2x2x1
jax: 0.10.0
libtpu: 0.0.40
codegen_flags: <defaults>
</compile_context>

<pallas_src>
import functools

import jax
import jax.numpy as jnp
from jax import lax
from jax.experimental import pallas as pl
from jax.experimental.pallas import tpu as pltpu


# ----------------------------------------------------------------------------
# Pallas kernel
# ----------------------------------------------------------------------------
def _conv_bn_relu_kernel(x_ref, w_ref, s_ref, b_ref, o_ref, xpad_ref, col_ref,
                         *, KH, KW, dil, pad, H, W, Cin, Cp, Wo, Hb, relu):
    """One (image n, output-row-block j) step of fused conv + folded-BN + ReLU.

    x_ref    : (1, H, W, Cin)    unpadded input image (resident across j)
    w_ref    : (KH*KW*Cin, Cp)   im2col weights, bf16, Cout padded to Cp
    s_ref    : (1, Cp)           folded BN scale (f32)
    b_ref    : (1, Cp)           folded BN bias  (f32)
    o_ref    : (1, Hb, Wo, Cp)   output row block
    xpad_ref : (Hp, Wp, Cin)     f32 scratch: zero-padded image (built at j==0)
    col_ref  : (Hb*Wo, K)        bf16 scratch: im2col slab for this row block
    """
    j = pl.program_id(1)

    # Build the zero-padded image in VMEM once per image (first row block);
    # it stays resident for the remaining row blocks of the same image.
    # This replaces a full-tensor HBM jnp.pad round trip.
    @pl.when(j == 0)
    def _():
        if pad > 0:
            xpad_ref[...] = jnp.zeros(xpad_ref.shape, xpad_ref.dtype)
        xpad_ref[pl.ds(pad, H), pl.ds(pad, W), :] = x_ref[0]

    row0 = pl.multiple_of(j * Hb, Hb)

    # Fold the KH*KW taps into the MXU contraction dim: pack shifted patches
    # into one im2col slab so the conv is a single (Hb*Wo, K) x (K, Cp) matmul
    # instead of KH*KW tiny K=Cin matmuls.
    for kh in range(KH):
        for kw in range(KW):
            t = kh * KW + kw
            patch = xpad_ref[pl.ds(row0 + kh * dil, Hb), pl.ds(kw * dil, Wo), :]
            col_ref[:, pl.ds(t * Cin, Cin)] = (
                patch.reshape(Hb * Wo, Cin).astype(col_ref.dtype))

    # Single MXU matmul: bf16 operands, f32 accumulation.
    acc = jnp.dot(col_ref[...], w_ref[...], preferred_element_type=jnp.float32)

    # Folded BatchNorm (eval-mode running stats) + ReLU, in f32.
    y = acc * s_ref[...] + b_ref[...]
    if relu:
        y = jnp.maximum(y, 0.0)

    # Lane-dense store: last dim is Cp (multiple of 128) -> unmasked vst.
    o_ref[...] = y.reshape(1, Hb, Wo, Cp).astype(o_ref.dtype)


# ----------------------------------------------------------------------------
# Wrapper
# ----------------------------------------------------------------------------
def basic_conv2d(x_nchw, params, *, stride=1, padding=0, dilation=1,
                 bn=True, relu=True, block_rows=8):
    """BasicConv2d.forward: Conv2d(bias=False) + BatchNorm2d(eval) + ReLU."""
    # TODO(synk): stride > 1 not implemented (module default stride=1).
    assert stride == 1, "stride > 1 not supported"
    N, Cin, H, W = x_nchw.shape
    w = params["conv_w"]                         # torch OIHW: (Cout, Cin, KH, KW)
    Cout, Cin_w, KH, KW = w.shape
    assert Cin_w == Cin
    Ho = H + 2 * padding - dilation * (KH - 1)
    Wo = W + 2 * padding - dilation * (KW - 1)
    assert Ho >= 1 and Wo >= 1

    # Fold eval-mode BatchNorm into per-channel scale/bias.
    eps = 1e-5
    if bn:
        scale = params["bn_gamma"] / jnp.sqrt(params["bn_var"] + eps)
        bias = params["bn_beta"] - params["bn_mean"] * scale
    else:
        scale = jnp.ones((Cout,), jnp.float32)
        bias = jnp.zeros((Cout,), jnp.float32)

    # Pad Cout to a multiple of 128: the MXU computes a 128-wide tile anyway,
    # and the epilogue/stores become full-lane.  Real channels sliced below.
    Cp = ((Cout + 127) // 128) * 128
    K = KH * KW * Cin

    # OIHW -> (KH, KW, Cin, Cout) -> folded im2col weights (K, Cp), bf16.
    w_col = jnp.transpose(w, (2, 3, 1, 0)).reshape(K, Cout)
    w_col = jnp.pad(w_col, ((0, 0), (0, Cp - Cout))).astype(jnp.bfloat16)
    scale_p = jnp.pad(scale, (0, Cp - Cout)).reshape(1, Cp).astype(jnp.float32)
    bias_p = jnp.pad(bias, (0, Cp - Cout)).reshape(1, Cp).astype(jnp.float32)

    # NCHW -> NHWC (channels-last, TPU-friendly).
    x = jnp.transpose(x_nchw, (0, 2, 3, 1))

    # Output-row block: multiple of 8 (sublane) dividing Ho, else whole image.
    Hb = block_rows if (block_rows % 8 == 0 and Ho % block_rows == 0) else Ho
    n_hblk = Ho // Hb
    Hp, Wp = H + 2 * padding, W + 2 * padding

    kern = functools.partial(
        _conv_bn_relu_kernel,
        KH=KH, KW=KW, dil=dilation, pad=padding,
        H=H, W=W, Cin=Cin, Cp=Cp, Wo=Wo, Hb=Hb, relu=relu)

    out = pl.pallas_call(
        kern,
        out_shape=jax.ShapeDtypeStruct((N, Ho, Wo, Cp), jnp.float32),
        grid_spec=pltpu.PrefetchScalarGridSpec(
            num_scalar_prefetch=0,
            grid=(N, n_hblk),
            in_specs=[
                # Whole image per batch element; block index constant along j
                # => fetched once per image and kept VMEM-resident.
                pl.BlockSpec((1, H, W, Cin), lambda n, j: (n, 0, 0, 0)),
                pl.BlockSpec((K, Cp), lambda n, j: (0, 0)),
                pl.BlockSpec((1, Cp), lambda n, j: (0, 0)),
                pl.BlockSpec((1, Cp), lambda n, j: (0, 0)),
            ],
            out_specs=pl.BlockSpec((1, Hb, Wo, Cp), lambda n, j: (n, j, 0, 0)),
            scratch_shapes=[
                pltpu.VMEM((Hp, Wp, Cin), jnp.float32),    # zero-padded image
                pltpu.VMEM((Hb * Wo, K), jnp.bfloat16),    # im2col slab
            ],
        ),
        compiler_params=pltpu.CompilerParams(
            # Batch axis across TensorCores (v7x has 2 TCs); the row-block
            # axis must be "arbitrary": it reuses the padded-image scratch
            # built at j == 0.  VMEM footprint here is a few hundred KB, well
            # inside the default scoped limit on v5e/v6e/v7x.
            dimension_semantics=("parallel", "arbitrary"),
        ),
    )(x, w_col, scale_p, bias_p)

    # Drop channel padding, back to NCHW.
    return jnp.transpose(out[..., :Cout], (0, 3, 1, 2))


# ----------------------------------------------------------------------------
# Pure-JAX reference (eval-mode BN) and parameter construction
# ----------------------------------------------------------------------------
def basic_conv2d_ref(x_nchw, params, *, stride=1, padding=0, dilation=1,
                     bn=True, relu=True):
    y = lax.conv_general_dilated(
        x_nchw, params["conv_w"],
        window_strides=(stride, stride),
        padding=((padding, padding), (padding, padding)),
        rhs_dilation=(dilation, dilation),
        dimension_numbers=("NCHW", "OIHW", "NCHW"),
        precision=lax.Precision.HIGHEST)
    if bn:
        eps = 1e-5
        scale = params["bn_gamma"] / jnp.sqrt(params["bn_var"] + eps)
        bias = params["bn_beta"] - params["bn_mean"] * scale
        y = y * scale.reshape(1, -1, 1, 1) + bias.reshape(1, -1, 1, 1)
    if relu:
        y = jnp.maximum(y, 0.0)
    return y


def init_basic_conv2d(key, cin, cout, k):
    kw_, kg, kb, km, kv = jax.random.split(key, 5)
    return {
        "conv_w": 0.1 * jax.random.normal(kw_, (cout, cin, k, k), jnp.float32),
        "bn_gamma": 1.0 + 0.05 * jax.random.normal(kg, (cout,), jnp.float32),
        "bn_beta": 0.05 * jax.random.normal(kb, (cout,), jnp.float32),
        "bn_mean": 0.05 * jax.random.normal(km, (cout,), jnp.float32),
        "bn_var": 1.0 + 0.05 * jnp.abs(jax.random.normal(kv, (cout,), jnp.float32)),
    }


# ----------------------------------------------------------------------------
if __name__ == "__main__":
    key = jax.random.PRNGKey(0)
    k_x, k_p = jax.random.split(key)

    N, Cin, H, W = 2, 8, 16, 16
    Cout = 16

    x = jax.random.normal(k_x, (N, Cin, H, W), jnp.float32)   # NCHW, like PyTorch

    # kernel_size / padding / dilation configurations BasicConv2d is used with.
    configs = [
        dict(ksize=3, padding=1, dilation=1),   # 3x3 "same"
        dict(ksize=3, padding=3, dilation=3),   # 3x3 dilated "same"
        dict(ksize=1, padding=0, dilation=1),   # 1x1 pointwise
    ]

    for i, cfg in enumerate(configs):
        params = init_basic_conv2d(jax.random.fold_in(k_p, i), Cin, Cout,
                                   cfg["ksize"])
        out = basic_conv2d(x, params, padding=cfg["padding"],
                           dilation=cfg["dilation"])
        jax.block_until_ready(out)
        ref = basic_conv2d_ref(x, params, padding=cfg["padding"],
                               dilation=cfg["dilation"])
        assert out.shape == ref.shape, (out.shape, ref.shape)
        err = float(jnp.max(jnp.abs(out - ref)))
        assert err < 3e-2, f"config {cfg}: max abs err {err}"

    print("KERNEL_OK")
</pallas_src>

<mosaic_0001>
module attributes {stable_mosaic.version = 11 : i64} {
  func.func @_conv_bn_relu_kernel(%arg0: i32, %arg1: i32, %arg2: memref<1x16x16x8xf32, #tpu.memory_space<vmem>>, %arg3: memref<72x128xbf16, #tpu.memory_space<vmem>>, %arg4: memref<1x128xf32, #tpu.memory_space<vmem>>, %arg5: memref<1x128xf32, #tpu.memory_space<vmem>>, %arg6: memref<1x8x16x128xf32, #tpu.memory_space<vmem>>, %arg7: memref<18x18x8xf32, #tpu.memory_space<vmem>>, %arg8: memref<128x72xbf16, #tpu.memory_space<vmem>>) attributes {dimension_semantics = [#tpu.dimension_semantics<parallel>, #tpu.dimension_semantics<arbitrary>], iteration_bounds = array<i64: 2, 2>, scalar_prefetch = 0 : i64, scratch_operands = 2 : i64, tpu.core_type = #tpu.core_type<tc>, window_params = [{transform_indices = @transform_0, window_bounds = array<i64: 1, 16, 16, 8>}, {pipeline_mode = #tpu.pipeline_mode<synchronous>, transform_indices = @transform_1, window_bounds = array<i64: 72, 128>}, {pipeline_mode = #tpu.pipeline_mode<synchronous>, transform_indices = @transform_2, window_bounds = array<i64: 1, 128>}, {pipeline_mode = #tpu.pipeline_mode<synchronous>, transform_indices = @transform_3, window_bounds = array<i64: 1, 128>}, {transform_indices = @transform_4, window_bounds = array<i64: 1, 8, 16, 128>}]} {
    %c0_i32 = arith.constant 0 : i32
    %0 = arith.cmpi eq, %arg1, %c0_i32 : i32
    %1 = arith.extui %0 : i1 to i32
    %c0_i32_0 = arith.constant 0 : i32
    %2 = arith.cmpi ne, %1, %c0_i32_0 : i32
    scf.if %2 {
      %cst_46 = arith.constant 0.000000e+00 : f32
      %72 = vector.broadcast %cst_46 : f32 to vector<18x18x8xf32>
      %c0_47 = arith.constant 0 : index
      %c0_48 = arith.constant 0 : index
      %c0_49 = arith.constant 0 : index
      %73 = vector.load %arg7[%c0_47, %c0_48, %c0_49] : memref<18x18x8xf32, #tpu.memory_space<vmem>>, vector<18x18x8xf32>
      tpu.vector_store %arg7[%c0_47, %c0_48, %c0_49], %72 {strides = array<i32>} : memref<18x18x8xf32, #tpu.memory_space<vmem>>, vector<18x18x8xf32>,
      %c0_50 = arith.constant 0 : index
      %c0_51 = arith.constant 0 : index
      %c0_52 = arith.constant 0 : index
      %c0_53 = arith.constant 0 : index
      %74 = vector.load %arg2[%c0_50, %c0_51, %c0_52, %c0_53] : memref<1x16x16x8xf32, #tpu.memory_space<vmem>>, vector<1x16x16x8xf32>
      %75 = vector.shape_cast %74 : vector<1x16x16x8xf32> to vector<16x16x8xf32>
      %c1_54 = arith.constant 1 : index
      %c1_55 = arith.constant 1 : index
      %c0_56 = arith.constant 0 : index
      %76 = vector.load %arg7[%c1_54, %c1_55, %c0_56] : memref<18x18x8xf32, #tpu.memory_space<vmem>>, vector<16x16x8xf32>
      tpu.vector_store %arg7[%c1_54, %c1_55, %c0_56], %75 {strides = array<i32>} : memref<18x18x8xf32, #tpu.memory_space<vmem>>, vector<16x16x8xf32>,
    } else {
    }
    %c8_i32 = arith.constant 8 : i32
    %3 = arith.muli %arg1, %c8_i32 : i32
    %4 = tpu.assume_multiple %3, 8 : i32
    %c0_i32_1 = arith.constant 0 : i32
    %5 = arith.addi %4, %c0_i32_1 : i32
    %6 = arith.index_cast %5 : i32 to index
    %c0 = arith.constant 0 : index
    %c0_2 = arith.constant 0 : index
    %7 = vector.load %arg7[%6, %c0, %c0_2] : memref<18x18x8xf32, #tpu.memory_space<vmem>>, vector<8x16x8xf32>
    %8 = vector.shape_cast %7 : vector<8x16x8xf32> to vector<128x8xf32>
    %9 = arith.truncf %8 : vector<128x8xf32> to vector<128x8xbf16>
    %c0_3 = arith.constant 0 : index
    %c0_4 = arith.constant 0 : index
    %10 = vector.load %arg8[%c0_3, %c0_4] : memref<128x72xbf16, #tpu.memory_space<vmem>>, vector<128x8xbf16>
    tpu.vector_store %arg8[%c0_3, %c0_4], %9 {strides = array<i32>} : memref<128x72xbf16, #tpu.memory_space<vmem>>, vector<128x8xbf16>,
    %c0_i32_5 = arith.constant 0 : i32
    %11 = arith.addi %4, %c0_i32_5 : i32
    %12 = arith.index_cast %11 : i32 to index
    %c1 = arith.constant 1 : index
    %c0_6 = arith.constant 0 : index
    %13 = vector.load %arg7[%12, %c1, %c0_6] : memref<18x18x8xf32, #tpu.memory_space<vmem>>, vector<8x16x8xf32>
    %14 = vector.shape_cast %13 : vector<8x16x8xf32> to vector<128x8xf32>
    %15 = arith.truncf %14 : vector<128x8xf32> to vector<128x8xbf16>
    %c0_7 = arith.constant 0 : index
    %c8 = arith.constant 8 : index
    %16 = vector.load %arg8[%c0_7, %c8] : memref<128x72xbf16, #tpu.memory_space<vmem>>, vector<128x8xbf16>
    tpu.vector_store %arg8[%c0_7, %c8], %15 {strides = array<i32>} : memref<128x72xbf16, #tpu.memory_space<vmem>>, vector<128x8xbf16>,
    %c0_i32_8 = arith.constant 0 : i32
    %17 = arith.addi %4, %c0_i32_8 : i32
    %18 = arith.index_cast %17 : i32 to index
    %c2 = arith.constant 2 : index
    %c0_9 = arith.constant 0 : index
    %19 = vector.load %arg7[%18, %c2, %c0_9] : memref<18x18x8xf32, #tpu.memory_space<vmem>>, vector<8x16x8xf32>
    %20 = vector.shape_cast %19 : vector<8x16x8xf32> to vector<128x8xf32>
    %21 = arith.truncf %20 : vector<128x8xf32> to vector<128x8xbf16>
    %c0_10 = arith.constant 0 : index
    %c16 = arith.constant 16 : index
    %22 = vector.load %arg8[%c0_10, %c16] : memref<128x72xbf16, #tpu.memory_space<vmem>>, vector<128x8xbf16>
    tpu.vector_store %arg8[%c0_10, %c16], %21 {strides = array<i32>} : memref<128x72xbf16, #tpu.memory_space<vmem>>, vector<128x8xbf16>,
    %c1_i32 = arith.constant 1 : i32
    %23 = arith.addi %4, %c1_i32 : i32
    %24 = arith.index_cast %23 : i32 to index
    %c0_11 = arith.constant 0 : index
    %c0_12 = arith.constant 0 : index
    %25 = vector.load %arg7[%24, %c0_11, %c0_12] : memref<18x18x8xf32, #tpu.memory_space<vmem>>, vector<8x16x8xf32>
    %26 = vector.shape_cast %25 : vector<8x16x8xf32> to vector<128x8xf32>
    %27 = arith.truncf %26 : vector<128x8xf32> to vector<128x8xbf16>
    %c0_13 = arith.constant 0 : index
    %c24 = arith.constant 24 : index
    %28 = vector.load %arg8[%c0_13, %c24] : memref<128x72xbf16, #tpu.memory_space<vmem>>, vector<128x8xbf16>
    tpu.vector_store %arg8[%c0_13, %c24], %27 {strides = array<i32>} : memref<128x72xbf16, #tpu.memory_space<vmem>>, vector<128x8xbf16>,
    %c1_i32_14 = arith.constant 1 : i32
    %29 = arith.addi %4, %c1_i32_14 : i32
    %30 = arith.index_cast %29 : i32 to index
    %c1_15 = arith.constant 1 : index
    %c0_16 = arith.constant 0 : index
    %31 = vector.load %arg7[%30, %c1_15, %c0_16] : memref<18x18x8xf32, #tpu.memory_space<vmem>>, vector<8x16x8xf32>
    %32 = vector.shape_cast %31 : vector<8x16x8xf32> to vector<128x8xf32>
    %33 = arith.truncf %32 : vector<128x8xf32> to vector<128x8xbf16>
    %c0_17 = arith.constant 0 : index
    %c32 = arith.constant 32 : index
    %34 = vector.load %arg8[%c0_17, %c32] : memref<128x72xbf16, #tpu.memory_space<vmem>>, vector<128x8xbf16>
    tpu.vector_store %arg8[%c0_17, %c32], %33 {strides = array<i32>} : memref<128x72xbf16, #tpu.memory_space<vmem>>, vector<128x8xbf16>,
    %c1_i32_18 = arith.constant 1 : i32
    %35 = arith.addi %4, %c1_i32_18 : i32
    %36 = arith.index_cast %35 : i32 to index
    %c2_19 = arith.constant 2 : index
    %c0_20 = arith.constant 0 : index
    %37 = vector.load %arg7[%36, %c2_19, %c0_20] : memref<18x18x8xf32, #tpu.memory_space<vmem>>, vector<8x16x8xf32>
    %38 = vector.shape_cast %37 : vector<8x16x8xf32> to vector<128x8xf32>
    %39 = arith.truncf %38 : vector<128x8xf32> to vector<128x8xbf16>
    %c0_21 = arith.constant 0 : index
    %c40 = arith.constant 40 : index
    %40 = vector.load %arg8[%c0_21, %c40] : memref<128x72xbf16, #tpu.memory_space<vmem>>, vector<128x8xbf16>
    tpu.vector_store %arg8[%c0_21, %c40], %39 {strides = array<i32>} : memref<128x72xbf16, #tpu.memory_space<vmem>>, vector<128x8xbf16>,
    %c2_i32 = arith.constant 2 : i32
    %41 = arith.addi %4, %c2_i32 : i32
    %42 = arith.index_cast %41 : i32 to index
    %c0_22 = arith.constant 0 : index
    %c0_23 = arith.constant 0 : index
    %43 = vector.load %arg7[%42, %c0_22, %c0_23] : memref<18x18x8xf32, #tpu.memory_space<vmem>>, vector<8x16x8xf32>
    %44 = vector.shape_cast %43 : vector<8x16x8xf32> to vector<128x8xf32>
    %45 = arith.truncf %44 : vector<128x8xf32> to vector<128x8xbf16>
    %c0_24 = arith.constant 0 : index
    %c48 = arith.constant 48 : index
    %46 = vector.load %arg8[%c0_24, %c48] : memref<128x72xbf16, #tpu.memory_space<vmem>>, vector<128x8xbf16>
    tpu.vector_store %arg8[%c0_24, %c48], %45 {strides = array<i32>} : memref<128x72xbf16, #tpu.memory_space<vmem>>, vector<128x8xbf16>,
    %c2_i32_25 = arith.constant 2 : i32
    %47 = arith.addi %4, %c2_i32_25 : i32
    %48 = arith.index_cast %47 : i32 to index
    %c1_26 = arith.constant 1 : index
    %c0_27 = arith.constant 0 : index
    %49 = vector.load %arg7[%48, %c1_26, %c0_27] : memref<18x18x8xf32, #tpu.memory_space<vmem>>, vector<8x16x8xf32>
    %50 = vector.shape_cast %49 : vector<8x16x8xf32> to vector<128x8xf32>
    %51 = arith.truncf %50 : vector<128x8xf32> to vector<128x8xbf16>
    %c0_28 = arith.constant 0 : index
    %c56 = arith.constant 56 : index
    %52 = vector.load %arg8[%c0_28, %c56] : memref<128x72xbf16, #tpu.memory_space<vmem>>, vector<128x8xbf16>
    tpu.vector_store %arg8[%c0_28, %c56], %51 {strides = array<i32>} : memref<128x72xbf16, #tpu.memory_space<vmem>>, vector<128x8xbf16>,
    %c2_i32_29 = arith.constant 2 : i32
    %53 = arith.addi %4, %c2_i32_29 : i32
    %54 = arith.index_cast %53 : i32 to index
    %c2_30 = arith.constant 2 : index
    %c0_31 = arith.constant 0 : index
    %55 = vector.load %arg7[%54, %c2_30, %c0_31] : memref<18x18x8xf32, #tpu.memory_space<vmem>>, vector<8x16x8xf32>
    %56 = vector.shape_cast %55 : vector<8x16x8xf32> to vector<128x8xf32>
    %57 = arith.truncf %56 : vector<128x8xf32> to vector<128x8xbf16>
    %c0_32 = arith.constant 0 : index
    %c64 = arith.constant 64 : index
    %58 = vector.load %arg8[%c0_32, %c64] : memref<128x72xbf16, #tpu.memory_space<vmem>>, vector<128x8xbf16>
    tpu.vector_store %arg8[%c0_32, %c64], %57 {strides = array<i32>} : memref<128x72xbf16, #tpu.memory_space<vmem>>, vector<128x8xbf16>,
    %c0_33 = arith.constant 0 : index
    %c0_34 = arith.constant 0 : index
    %59 = vector.load %arg8[%c0_33, %c0_34] : memref<128x72xbf16, #tpu.memory_space<vmem>>, vector<128x72xbf16>
    %c0_35 = arith.constant 0 : index
    %c0_36 = arith.constant 0 : index
    %60 = vector.load %arg3[%c0_35, %c0_36] : memref<72x128xbf16, #tpu.memory_space<vmem>>, vector<72x128xbf16>
    %cst = arith.constant dense<0.000000e+00> : vector<128x128xf32>
    %61 = tpu.matmul %59, %60, %cst {dimension_numbers = #tpu.dot_dimension_numbers<[1], [0], [0], [1], [0, 0, 1, 1], [], []>} : vector<128x72xbf16>, vector<72x128xbf16>, vector<128x128xf32> -> vector<128x128xf32>
    %c0_37 = arith.constant 0 : index
    %c0_38 = arith.constant 0 : index
    %62 = vector.load %arg4[%c0_37, %c0_38] : memref<1x128xf32, #tpu.memory_space<vmem>>, vector<1x128xf32>
    %63 = vector.broadcast %62 : vector<1x128xf32> to vector<128x128xf32>
    %64 = arith.mulf %61, %63 : vector<128x128xf32>
    %c0_39 = arith.constant 0 : index
    %c0_40 = arith.constant 0 : index
    %65 = vector.load %arg5[%c0_39, %c0_40] : memref<1x128xf32, #tpu.memory_space<vmem>>, vector<1x128xf32>
    %66 = vector.broadcast %65 : vector<1x128xf32> to vector<128x128xf32>
    %67 = arith.addf %64, %66 : vector<128x128xf32>
    %cst_41 = arith.constant 0.000000e+00 : f32
    %68 = vector.broadcast %cst_41 : f32 to vector<128x128xf32>
    %69 = arith.maximumf %67, %68 : vector<128x128xf32>
    %70 = vector.shape_cast %69 : vector<128x128xf32> to vector<1x8x16x128xf32>
    %c0_42 = arith.constant 0 : index
    %c0_43 = arith.constant 0 : index
    %c0_44 = arith.constant 0 : index
    %c0_45 = arith.constant 0 : index
    %71 = vector.load %arg6[%c0_42, %c0_43, %c0_44, %c0_45] : memref<1x8x16x128xf32, #tpu.memory_space<vmem>>, vector<1x8x16x128xf32>
    tpu.vector_store %arg6[%c0_42, %c0_43, %c0_44, %c0_45], %70 {strides = array<i32>} : memref<1x8x16x128xf32, #tpu.memory_space<vmem>>, vector<1x8x16x128xf32>,
    return
  }
  func.func @transform_0(%arg0: i32, %arg1: i32) -> (i32, i32, i32, i32) {
    %c0_i32 = arith.constant 0 : i32
    %c0_i32_0 = arith.constant 0 : i32
    %c0_i32_1 = arith.constant 0 : i32
    %c0_i32_2 = arith.constant 0 : i32
    return %arg0, %c0_i32, %c0_i32_0, %c0_i32_1 : i32, i32, i32, i32
  }
  func.func @transform_1(%arg0: i32, %arg1: i32) -> (i32, i32) {
    %c0_i32 = arith.constant 0 : i32
    %c0_i32_0 = arith.constant 0 : i32
    %c0_i32_1 = arith.constant 0 : i32
    return %c0_i32, %c0_i32_0 : i32, i32
  }
  func.func @transform_2(%arg0: i32, %arg1: i32) -> (i32, i32) {
    %c0_i32 = arith.constant 0 : i32
    %c0_i32_0 = arith.constant 0 : i32
    %c0_i32_1 = arith.constant 0 : i32
    return %c0_i32, %c0_i32_0 : i32, i32
  }
  func.func @transform_3(%arg0: i32, %arg1: i32) -> (i32, i32) {
    %c0_i32 = arith.constant 0 : i32
    %c0_i32_0 = arith.constant 0 : i32
    %c0_i32_1 = arith.constant 0 : i32
    return %c0_i32, %c0_i32_0 : i32, i32
  }
  func.func @transform_4(%arg0: i32, %arg1: i32) -> (i32, i32, i32, i32) {
    %c0_i32 = arith.constant 0 : i32
    %c0_i32_0 = arith.constant 0 : i32
    %c0_i32_1 = arith.constant 0 : i32
    return %arg0, %arg1, %c0_i32, %c0_i32_0 : i32, i32, i32, i32
  }
}

</mosaic_0001>

<llo_original>
// kernel: tpu_custom_call.1
$region0: #{tpu_custom_call.1}
  #allocation0 [shape = 'u32[]', space=smem, size = 0x4, offset = 0x4, fixed_abs, tag = 'smem constant byte address 0x4 - core index']
  #allocation1 [shape = 'u32[144,128]{1,0:T(1,128)}', space=vmem, size = 0x12000, scoped, tag = 'internal scratch']
  #allocation2 [shape = 'f32[18,18,8]{2,1,0:T(8,128)}', space=vmem, size = 0x36000, scoped, tag = 'scratch operand']
  #allocation3 [shape = 'bf16[128,72]{1,0:T(8,128)(2,1)}', space=vmem, size = 0x8000, scoped, tag = 'scratch operand']
  %s0 = inlined_call_operand.vmem [shape: f32[2,16,16,8], index: 0, kind: input, shape index: {}]
  %s1 = inlined_call_operand.vmem [shape: bf16[72,128], index: 1, kind: input, shape index: {}]
  %s2 = inlined_call_operand.vmem [shape: f32[1,128], index: 2, kind: input, shape index: {}]
  %s3 = inlined_call_operand.vmem [shape: f32[1,128], index: 3, kind: input, shape index: {}]
  %s4 = inlined_call_operand.hbm [shape: f32[2,16,16,128], index: 4, kind: output, shape index: {}]
  %s5 = sld [smem:[#allocation0]]
  $region53: #{tpu_custom_call.1} parent=0
    _
  %s7 = ssub.s32 1, %s5
  %s8 = scalar_select 0, %s7, %s5
  $region1: #{tpu_custom_call.1} parent=0
    #allocation4 [shape = 'u8[131072]{0}', space=vmem, size = 0x20000, scoped, tag = 'output window, operand 0']
    #allocation5 [shape = 's32[2]{0}', space=sflag, size = 0x8, scoped, tag = 'scoped memory for tpu_custom_call.1']
    %9 = vsyncpa [#allocation5], 0
    %s10 = scalar_lea.sflag [#allocation5], 1
    %11 = vsyncpa %s10, 0
    loop: start=0, step=1, limit=6
    $region2: #{tpu_custom_call.1} parent=1 // loop_pre_header
      _
    $region3: #{tpu_custom_call.1} parent=1 // loop_header
      %s13 = sphi 0, %s17
      %p14 = scmp.ge.s32.totalorder %s13, 6
      %s20 = sphi 0, %s32
      %s21 = sphi 0, %s28
      %s22 = sphi 0, %s20
      %s23 = sphi 0, %s21
      %s24 = sphi 0, %s22
      %s25 = sphi 0, %s23
      %s35 = sphi 0, %s37
      %s38 = sphi 0, %s35
      %s39 = sphi 0, %s38
      %s55 = sphi 0, %s39
      %s59 = sphi 0, %s59
      %s61 = sphi 0, %s59
      %s62 = sphi 0, %s61
      %s76 = sphi 0, %s62
      %s80 = sphi 0, %s80
      %s82 = sphi 0, %s80
      %s83 = sphi 0, %s82
      %s97 = sphi 0, %s83
      %s101 = sphi 0, %s101
      %s103 = sphi 0, %s101
      %s104 = sphi 0, %s103
      %s118 = sphi 0, %s104
      %s126 = sphi 0, %s128
      %s129 = sphi 0, %s126
      %s130 = sphi 0, %s129
      %s146 = sphi 0, %s130
    $region4: #{tpu_custom_call.1} parent=1 // loop_header_branch
      %16 = sbr.rel (%p14) target = $region8
    $region5: #{tpu_custom_call.1} parent=1 // loop_body
      %s18 = ssub.s32 %s13, 1
      %s19 = ssub.s32 %s13, 2
      %s26 = sadd.s32 1, %s21
      %p27 = scmp.ge.s32.totalorder %s26, 2
      %s28 = scalar_select %p27, 0, %s26
      %s29 = sadd.s32 1, %s20
      %s30 = scalar_select %p27, %s29, %s20
      %p31 = scmp.ge.s32.totalorder %s30, 2
      %s32 = scalar_select %p31, 0, %s30
      %s33 = ssub.s32 %s20, %s32
      %p34 = scmp.eq.s32.totalorder %s33, 0
      %s36 = sadd.s32 %s35, 1
      %s37 = scalar_select %p34, %s35, %s36
      %p40 = pneg %p34
      %p41 = scmp.eq.s32.totalorder %s13, 3
      %p42 = por %p40, %p41
      %p43 = scmp.ne.s32.totalorder %s35, %s38
      %p44 = scmp.eq.s32.totalorder %s13, 0
      %p45 = por %p43, %p44
      %p46 = scmp.ne.s32.totalorder %s35, %s38
      %p47 = scmp.eq.s32.totalorder %s18, 3
      %p48 = por %p46, %p47
      %p49 = scmp.ne.s32.totalorder %s38, %s39
      %p50 = scmp.eq.s32.totalorder %s18, 0
      %p51 = por %p49, %p50
      %p52 = scmp.ne.s32.totalorder %s38, %s39
      %p53 = scmp.eq.s32.totalorder %s19, 3
      %p54 = por %p52, %p53
      %p56 = scmp.ne.s32.totalorder %s39, %s55
      %p57 = scmp.eq.s32.totalorder %s19, 0
      %p58 = por %p56, %p57
      %s60 = sadd.s32 %s59, 1
      %p63 = scmp.eq.s32.totalorder %s13, 3
      %p64 = scmp.ne.s32.totalorder %s59, %s61
      %p65 = scmp.eq.s32.totalorder %s13, 0
      %p66 = por %p64, %p65
      %p67 = scmp.ne.s32.totalorder %s59, %s61
      %p68 = scmp.eq.s32.totalorder %s18, 3
      %p69 = por %p67, %p68
      %p70 = scmp.ne.s32.totalorder %s61, %s62
      %p71 = scmp.eq.s32.totalorder %s18, 0
      %p72 = por %p70, %p71
      %p73 = scmp.ne.s32.totalorder %s61, %s62
      %p74 = scmp.eq.s32.totalorder %s19, 3
      %p75 = por %p73, %p74
      %p77 = scmp.ne.s32.totalorder %s62, %s76
      %p78 = scmp.eq.s32.totalorder %s19, 0
      %p79 = por %p77, %p78
      %s81 = sadd.s32 %s80, 1
      %p84 = scmp.eq.s32.totalorder %s13, 3
      %p85 = scmp.ne.s32.totalorder %s80, %s82
      %p86 = scmp.eq.s32.totalorder %s13, 0
      %p87 = por %p85, %p86
      %p88 = scmp.ne.s32.totalorder %s80, %s82
      %p89 = scmp.eq.s32.totalorder %s18, 3
      %p90 = por %p88, %p89
      %p91 = scmp.ne.s32.totalorder %s82, %s83
      %p92 = scmp.eq.s32.totalorder %s18, 0
      %p93 = por %p91, %p92
      %p94 = scmp.ne.s32.totalorder %s82, %s83
      %p95 = scmp.eq.s32.totalorder %s19, 3
      %p96 = por %p94, %p95
      %p98 = scmp.ne.s32.totalorder %s83, %s97
      %p99 = scmp.eq.s32.totalorder %s19, 0
      %p100 = por %p98, %p99
      %s102 = sadd.s32 %s101, 1
      %p105 = scmp.eq.s32.totalorder %s13, 3
      %p106 = scmp.ne.s32.totalorder %s101, %s103
      %p107 = scmp.eq.s32.totalorder %s13, 0
      %p108 = por %p106, %p107
      %p109 = scmp.ne.s32.totalorder %s101, %s103
      %p110 = scmp.eq.s32.totalorder %s18, 3
      %p111 = por %p109, %p110
      %p112 = scmp.ne.s32.totalorder %s103, %s104
      %p113 = scmp.eq.s32.totalorder %s18, 0
      %p114 = por %p112, %p113
      %p115 = scmp.ne.s32.totalorder %s103, %s104
      %p116 = scmp.eq.s32.totalorder %s19, 3
      %p117 = por %p115, %p116
      %p119 = scmp.ne.s32.totalorder %s104, %s118
      %p120 = scmp.eq.s32.totalorder %s19, 0
      %p121 = por %p119, %p120
      %s122 = ssub.s32 %s20, %s32
      %s123 = ssub.s32 %s21, %s28
      %s124 = sor.u32 %s122, %s123
      %p125 = scmp.eq.s32.totalorder %s124, 0
      %s127 = sadd.s32 %s126, 1
      %s128 = scalar_select %p125, %s126, %s127
      %p131 = pneg %p125
      %p132 = scmp.eq.s32.totalorder %s13, 3
      %p133 = por %p131, %p132
      %p134 = scmp.ne.s32.totalorder %s126, %s129
      %p135 = scmp.eq.s32.totalorder %s13, 0
      %p136 = por %p134, %p135
      %p137 = scmp.ne.s32.totalorder %s126, %s129
      %p138 = scmp.eq.s32.totalorder %s18, 3
      %p139 = por %p137, %p138
      %p140 = scmp.ne.s32.totalorder %s129, %s130
      %p141 = scmp.eq.s32.totalorder %s18, 0
      %p142 = por %p140, %p141
      %p143 = scmp.ne.s32.totalorder %s129, %s130
      %p144 = scmp.eq.s32.totalorder %s19, 3
      %p145 = por %p143, %p144
      %p147 = scmp.ne.s32.totalorder %s130, %s146
      %p148 = scmp.eq.s32.totalorder %s19, 0
      %p149 = por %p147, %p148
      %p150 = scmp.le.s32.totalorder 1, %s13
      %p151 = scmp.lt.s32.totalorder %s13, 5
      %p152 = pnand %p150, %p151
      %p153 = pneg %p152
      // Predicated region
      $region9: #{tpu_custom_call.1} parent=5 // pred_check
        _
      $region10: #{tpu_custom_call.1} parent=5 // pred_check_branch
        %155 = sbr.rel (%p152) target = $region12
      $region11: #{tpu_custom_call.1} parent=5 // pred_region
        %s156 = ssub.s32 %s13, 1
        // Predicated region
        $region13: #{tpu_custom_call.1} parent=11 // pred_check
          %p157 = pneg %p72
        $region14: #{tpu_custom_call.1} parent=11 // pred_check_branch
          %159 = sbr.rel (%p157) target = $region16
        $region15: #{tpu_custom_call.1} parent=11 // pred_region
          _
        $region16: #{tpu_custom_call.1} parent=11 // pred_fallthru
          _
        // Predicated region
        $region17: #{tpu_custom_call.1} parent=11 // pred_check
          %p160 = pneg %p93
        $region18: #{tpu_custom_call.1} parent=11 // pred_check_branch
          %162 = sbr.rel (%p160) target = $region20
        $region19: #{tpu_custom_call.1} parent=11 // pred_region
          _
        $region20: #{tpu_custom_call.1} parent=11 // pred_fallthru
          _
        // Predicated region
        $region21: #{tpu_custom_call.1} parent=11 // pred_check
          %p163 = pneg %p114
        $region22: #{tpu_custom_call.1} parent=11 // pred_check_branch
          %165 = sbr.rel (%p163) target = $region24
        $region23: #{tpu_custom_call.1} parent=11 // pred_region
          _
        $region24: #{tpu_custom_call.1} parent=11 // pred_fallthru
          _
      $region12: #{tpu_custom_call.1} parent=5 // pred_fallthru
        _
      %p166 = scmp.lt.s32.totalorder %s13, 4
      // Predicated region
      $region25: #{tpu_custom_call.1} parent=5 // pred_check
        %p167 = pneg %p166
      $region26: #{tpu_custom_call.1} parent=5 // pred_check_branch
        %169 = sbr.rel (%p167) target = $region28
      $region27: #{tpu_custom_call.1} parent=5 // pred_region
        // Predicated region
        $region29: #{tpu_custom_call.1} parent=27 // pred_check
          %p170 = pneg %p45
        $region30: #{tpu_custom_call.1} parent=27 // pred_check_branch
          %172 = sbr.rel (%p170) target = $region32
        $region31: #{tpu_custom_call.1} parent=27 // pred_region
          %p173 = scmp.lt.s32.totalorder %s20, 1
          %s174 = scalar_select %p173, %s20, 1
          %s175 = smul.addr %s174, 32
          %s176 = smul.addr %s175, 8
          %s177 = scalar_lea.vmem %s0, %s176
        $region32: #{tpu_custom_call.1} parent=27 // pred_fallthru
          _
      $region28: #{tpu_custom_call.1} parent=5 // pred_fallthru
        _
      %p178 = scmp.le.s32.totalorder 1, %s13
      %p179 = scmp.lt.s32.totalorder %s13, 5
      %p180 = pnand %p178, %p179
      %p181 = pneg %p180
      // Predicated region
      $region33: #{tpu_custom_call.1} parent=5 // pred_check
        _
      $region34: #{tpu_custom_call.1} parent=5 // pred_check_branch
        %183 = sbr.rel (%p180) target = $region36
      $region35: #{tpu_custom_call.1} parent=5 // pred_region
        %s184 = ssub.s32 %s13, 1
        %p185 = scmp.lt.s32.totalorder %s22, 1
        %s186 = scalar_select %p185, %s22, 1
        %s187 = smul.addr %s186, 32
        %s188 = smul.addr %s187, 8
        %s189 = scalar_lea.vmem %s0, %s188
        %p190 = pneg %p51
        %p191 = pneg %p48
        %p192 = pneg %p72
        %p193 = pneg %p69
        %p194 = pneg %p93
        %p195 = pneg %p90
        %p196 = pneg %p114
        %p197 = pneg %p111
        %p198 = pneg %p142
        %p199 = pneg %p139
        %s200 = sand.u32 %s129, 1
        %s201 = scalar_lea.sflag [#allocation5], %s200
        %s202 = sand.u32 %s129, 1
        %s203 = smul.addr %s202, 128
        %s204 = scalar_lea.vmem [#allocation4], %s203
        %p205 = scmp.lt.s32.totalorder %s22, 1
        %s206 = scalar_select %p205, %s22, 1
        %s207 = smul.addr %s206, 32
        %s208 = smul.addr %s207, 8
        %s209 = scalar_lea.vmem %s0, %s208
        %s210 = smul.u32 8, %s23
        %p212 = scmp.eq.s32.totalorder %s23, 0
        // Predicated region
        $region37: #{tpu_custom_call.1} parent=35 // pred_check
          %p213 = pneg %p212
        $region38: #{tpu_custom_call.1} parent=35 // pred_check_branch
          %215 = sbr.rel (%p213) target = $region40
        $region39: #{tpu_custom_call.1} parent=35 // pred_region
          %vm216 = vcmask 64512
          %217 = vst.msk [vmem:[#allocation2] sm:$0xff] %vm216, 0.0
          %218 = vst.msk [vmem:[#allocation2 + $0x8] sm:$0xff] %vm216, 0.0
          %vm219 = vcmask 58368
          %220 = vst.msk [vmem:[#allocation2 + $0x10] sm:$0x3] %vm219, 0.0
          %221 = vst.msk [vmem:[#allocation2 + $0x18] sm:$0xff] %vm216, 0.0
          %222 = vst.msk [vmem:[#allocation2 + $0x20] sm:$0xff] %vm216, 0.0
          %223 = vst.msk [vmem:[#allocation2 + $0x28] sm:$0x3] %vm219, 0.0
          %224 = vst.msk [vmem:[#allocation2 + $0x30] sm:$0xff] %vm216, 0.0
          %225 = vst.msk [vmem:[#allocation2 + $0x38] sm:$0xff] %vm216, 0.0
          %226 = vst.msk [vmem:[#allocation2 + $0x40] sm:$0x3] %vm219, 0.0
          %227 = vst.msk [vmem:[#allocation2 + $0x48] sm:$0xff] %vm216, 0.0
          %228 = vst.msk [vmem:[#allocation2 + $0x50] sm:$0xff] %vm216, 0.0
          %229 = vst.msk [vmem:[#allocation2 + $0x58] sm:$0x3] %vm219, 0.0
          %230 = vst.msk [vmem:[#allocation2 + $0x60] sm:$0xff] %vm216, 0.0
          %231 = vst.msk [vmem:[#allocation2 + $0x68] sm:$0xff] %vm216, 0.0
          %232 = vst.msk [vmem:[#allocation2 + $0x70] sm:$0x3] %vm219, 0.0
          %233 = vst.msk [vmem:[#allocation2 + $0x78] sm:$0xff] %vm216, 0.0
          %234 = vst.msk [vmem:[#allocation2 + $0x80] sm:$0xff] %vm216, 0.0
          %235 = vst.msk [vmem:[#allocation2 + $0x88] sm:$0x3] %vm219, 0.0
          %236 = vst.msk [vmem:[#allocation2 + $0x90] sm:$0xff] %vm216, 0.0
          %237 = vst.msk [vmem:[#allocation2 + $0x98] sm:$0xff] %vm216, 0.0
          %238 = vst.msk [vmem:[#allocation2 + $0xa0] sm:$0x3] %vm219, 0.0
          %239 = vst.msk [vmem:[#allocation2 + $0xa8] sm:$0xff] %vm216, 0.0
          %240 = vst.msk [vmem:[#allocation2 + $0xb0] sm:$0xff] %vm216, 0.0
          %241 = vst.msk [vmem:[#allocation2 + $0xb8] sm:$0x3] %vm219, 0.0
          %242 = vst.msk [vmem:[#allocation2 + $0xc0] sm:$0xff] %vm216, 0.0
          %243 = vst.msk [vmem:[#allocation2 + $0xc8] sm:$0xff] %vm216, 0.0
          %244 = vst.msk [vmem:[#allocation2 + $0xd0] sm:$0x3] %vm219, 0.0
          %245 = vst.msk [vmem:[#allocation2 + $0xd8] sm:$0xff] %vm216, 0.0
          %246 = vst.msk [vmem:[#allocation2 + $0xe0] sm:$0xff] %vm216, 0.0
          %247 = vst.msk [vmem:[#allocation2 + $0xe8] sm:$0x3] %vm219, 0.0
          %248 = vst.msk [vmem:[#allocation2 + $0xf0] sm:$0xff] %vm216, 0.0
          %249 = vst.msk [vmem:[#allocation2 + $0xf8] sm:$0xff] %vm216, 0.0
          %250 = vst.msk [vmem:[#allocation2 + $0x100] sm:$0x3] %vm219, 0.0
          %251 = vst.msk [vmem:[#allocation2 + $0x108] sm:$0xff] %vm216, 0.0
          %252 = vst.msk [vmem:[#allocation2 + $0x110] sm:$0xff] %vm216, 0.0
          %253 = vst.msk [vmem:[#allocation2 + $0x118] sm:$0x3] %vm219, 0.0
          %254 = vst.msk [vmem:[#allocation2 + $0x120] sm:$0xff] %vm216, 0.0
          %255 = vst.msk [vmem:[#allocation2 + $0x128] sm:$0xff] %vm216, 0.0
          %256 = vst.msk [vmem:[#allocation2 + $0x130] sm:$0x3] %vm219, 0.0
          %257 = vst.msk [vmem:[#allocation2 + $0x138] sm:$0xff] %vm216, 0.0
          %258 = vst.msk [vmem:[#allocation2 + $0x140] sm:$0xff] %vm216, 0.0
          %259 = vst.msk [vmem:[#allocation2 + $0x148] sm:$0x3] %vm219, 0.0
          %260 = vst.msk [vmem:[#allocation2 + $0x150] sm:$0xff] %vm216, 0.0
          %261 = vst.msk [vmem:[#allocation2 + $0x158] sm:$0xff] %vm216, 0.0
          %262 = vst.msk [vmem:[#allocation2 + $0x160] sm:$0x3] %vm219, 0.0
          %263 = vst.msk [vmem:[#allocation2 + $0x168] sm:$0xff] %vm216, 0.0
          %264 = vst.msk [vmem:[#allocation2 + $0x170] sm:$0xff] %vm216, 0.0
          %265 = vst.msk [vmem:[#allocation2 + $0x178] sm:$0x3] %vm219, 0.0
          %266 = vst.msk [vmem:[#allocation2 + $0x180] sm:$0xff] %vm216, 0.0
          %267 = vst.msk [vmem:[#allocation2 + $0x188] sm:$0xff] %vm216, 0.0
          %268 = vst.msk [vmem:[#allocation2 + $0x190] sm:$0x3] %vm219, 0.0
          %269 = vst.msk [vmem:[#allocation2 + $0x198] sm:$0xff] %vm216, 0.0
          %270 = vst.msk [vmem:[#allocation2 + $0x1a0] sm:$0xff] %vm216, 0.0
          %271 = vst.msk [vmem:[#allocation2 + $0x1a8] sm:$0x3] %vm219, 0.0
          %v272 = vld [vmem:[%s209] sm:$0xff]
          %v273 = vld [vmem:[%s209 + $0x8] sm:$0xff]
          %v274 = vld [vmem:[%s209 + $0x10] sm:$0xff]
          %v275 = vld [vmem:[%s209 + $0x18] sm:$0xff]
          %v276 = vld [vmem:[%s209 + $0x20] sm:$0xff]
          %v277 = vld [vmem:[%s209 + $0x28] sm:$0xff]
          %v278 = vld [vmem:[%s209 + $0x30] sm:$0xff]
          %v279 = vld [vmem:[%s209 + $0x38] sm:$0xff]
          %v280 = vld [vmem:[%s209 + $0x40] sm:$0xff]
          %v281 = vld [vmem:[%s209 + $0x48] sm:$0xff]
          %v282 = vld [vmem:[%s209 + $0x50] sm:$0xff]
          %v283 = vld [vmem:[%s209 + $0x58] sm:$0xff]
          %v284 = vld [vmem:[%s209 + $0x60] sm:$0xff]
          %v285 = vld [vmem:[%s209 + $0x68] sm:$0xff]
          %v286 = vld [vmem:[%s209 + $0x70] sm:$0xff]
          %v287 = vld [vmem:[%s209 + $0x78] sm:$0xff]
          %v288 = vld [vmem:[%s209 + $0x80] sm:$0xff]
          %v289 = vld [vmem:[%s209 + $0x88] sm:$0xff]
          %v290 = vld [vmem:[%s209 + $0x90] sm:$0xff]
          %v291 = vld [vmem:[%s209 + $0x98] sm:$0xff]
          %v292 = vld [vmem:[%s209 + $0xa0] sm:$0xff]
          %v293 = vld [vmem:[%s209 + $0xa8] sm:$0xff]
          %v294 = vld [vmem:[%s209 + $0xb0] sm:$0xff]
          %v295 = vld [vmem:[%s209 + $0xb8] sm:$0xff]
          %v296 = vld [vmem:[%s209 + $0xc0] sm:$0xff]
          %v297 = vld [vmem:[%s209 + $0xc8] sm:$0xff]
          %v298 = vld [vmem:[%s209 + $0xd0] sm:$0xff]
          %v299 = vld [vmem:[%s209 + $0xd8] sm:$0xff]
          %v300 = vld [vmem:[%s209 + $0xe0] sm:$0xff]
          %v301 = vld [vmem:[%s209 + $0xe8] sm:$0xff]
          %v302 = vld [vmem:[%s209 + $0xf0] sm:$0xff]
          %v303 = vld [vmem:[%s209 + $0xf8] sm:$0xff]
          %s304 = scalar_lea.vmem [#allocation2], 24
          %305 = vst.msk [vmem:[%s304 + $0x1] sm:$0xff] %vm216, %v272
          %306 = vst.msk [vmem:[%s304 + $0x9] sm:$0xff] %vm216, %v273
          %307 = vst.msk [vmem:[%s304 + $0x19] sm:$0xff] %vm216, %v274
          %308 = vst.msk [vmem:[%s304 + $0x21] sm:$0xff] %vm216, %v275
          %309 = vst.msk [vmem:[%s304 + $0x31] sm:$0xff] %vm216, %v276
          %310 = vst.msk [vmem:[%s304 + $0x39] sm:$0xff] %vm216, %v277
          %311 = vst.msk [vmem:[%s304 + $0x49] sm:$0xff] %vm216, %v278
          %312 = vst.msk [vmem:[%s304 + $0x51] sm:$0xff] %vm216, %v279
          %313 = vst.msk [vmem:[%s304 + $0x61] sm:$0xff] %vm216, %v280
          %314 = vst.msk [vmem:[%s304 + $0x69] sm:$0xff] %vm216, %v281
          %315 = vst.msk [vmem:[%s304 + $0x79] sm:$0xff] %vm216, %v282
          %316 = vst.msk [vmem:[%s304 + $0x81] sm:$0xff] %vm216, %v283
          %317 = vst.msk [vmem:[%s304 + $0x91] sm:$0xff] %vm216, %v284
          %318 = vst.msk [vmem:[%s304 + $0x99] sm:$0xff] %vm216, %v285
          %319 = vst.msk [vmem:[%s304 + $0xa9] sm:$0xff] %vm216, %v286
          %320 = vst.msk [vmem:[%s304 + $0xb1] sm:$0xff] %vm216, %v287
          %321 = vst.msk [vmem:[%s304 + $0xc1] sm:$0xff] %vm216, %v288
          %322 = vst.msk [vmem:[%s304 + $0xc9] sm:$0xff] %vm216, %v289
          %323 = vst.msk [vmem:[%s304 + $0xd9] sm:$0xff] %vm216, %v290
          %324 = vst.msk [vmem:[%s304 + $0xe1] sm:$0xff] %vm216, %v291
          %325 = vst.msk [vmem:[%s304 + $0xf1] sm:$0xff] %vm216, %v292
          %326 = vst.msk [vmem:[%s304 + $0xf9] sm:$0xff] %vm216, %v293
          %327 = vst.msk [vmem:[%s304 + $0x109] sm:$0xff] %vm216, %v294
          %328 = vst.msk [vmem:[%s304 + $0x111] sm:$0xff] %vm216, %v295
          %329 = vst.msk [vmem:[%s304 + $0x121] sm:$0xff] %vm216, %v296
          %330 = vst.msk [vmem:[%s304 + $0x129] sm:$0xff] %vm216, %v297
          %331 = vst.msk [vmem:[%s304 + $0x139] sm:$0xff] %vm216, %v298
          %332 = vst.msk [vmem:[%s304 + $0x141] sm:$0xff] %vm216, %v299
          %333 = vst.msk [vmem:[%s304 + $0x151] sm:$0xff] %vm216, %v300
          %334 = vst.msk [vmem:[%s304 + $0x159] sm:$0xff] %vm216, %v301
          %335 = vst.msk [vmem:[%s304 + $0x169] sm:$0xff] %vm216, %v302
          %336 = vst.msk [vmem:[%s304 + $0x171] sm:$0xff] %vm216, %v303
        $region40: #{tpu_custom_call.1} parent=35 // pred_fallthru
          _
        %s337 = smul.u32 %s23, 8
        %s338 = smul.u32 %s337, 24
        %s339 = scalar_lea.vmem [#allocation2], %s338
        %v340 = vld [vmem:[%s339] sm:$0xff]
        %v341 = vld [vmem:[%s339 + $0x8] sm:$0xff]
        %v342 = vld [vmem:[%s339 + $0x18] sm:$0xff]
        %v343 = vld [vmem:[%s339 + $0x20] sm:$0xff]
        %v344 = vld [vmem:[%s339 + $0x30] sm:$0xff]
        %v345 = vld [vmem:[%s339 + $0x38] sm:$0xff]
        %v346 = vld [vmem:[%s339 + $0x48] sm:$0xff]
        %v347 = vld [vmem:[%s339 + $0x50] sm:$0xff]
        %v348 = vld [vmem:[%s339 + $0x60] sm:$0xff]
        %v349 = vld [vmem:[%s339 + $0x68] sm:$0xff]
        %v350 = vld [vmem:[%s339 + $0x78] sm:$0xff]
        %v351 = vld [vmem:[%s339 + $0x80] sm:$0xff]
        %v352 = vld [vmem:[%s339 + $0x90] sm:$0xff]
        %v353 = vld [vmem:[%s339 + $0x98] sm:$0xff]
        %v354 = vld [vmem:[%s339 + $0xa8] sm:$0xff]
        %v355 = vld [vmem:[%s339 + $0xb0] sm:$0xff]
        %v356 = vpack.c.bf16 %v341, %v340
        %v357 = vpack.c.bf16 %v343, %v342
        %v358 = vpack.c.bf16 %v345, %v344
        %v359 = vpack.c.bf16 %v347, %v346
        %v360 = vpack.c.bf16 %v349, %v348
        %v361 = vpack.c.bf16 %v351, %v350
        %v362 = vpack.c.bf16 %v353, %v352
        %v363 = vpack.c.bf16 %v355, %v354
        %v372 = vunpack.c.l.b16 %v356
        %v373 = vunpack.c.h.b16 %v356
        %v374 = vunpack.c.l.b16 %v357
        %v375 = vunpack.c.h.b16 %v357
        %v376 = vunpack.c.l.b16 %v358
        %v377 = vunpack.c.h.b16 %v358
        %v378 = vunpack.c.l.b16 %v359
        %v379 = vunpack.c.h.b16 %v359
        %v380 = vunpack.c.l.b16 %v360
        %v381 = vunpack.c.h.b16 %v360
        %v382 = vunpack.c.l.b16 %v361
        %v383 = vunpack.c.h.b16 %v361
        %v384 = vunpack.c.l.b16 %v362
        %v385 = vunpack.c.h.b16 %v362
        %v386 = vunpack.c.l.b16 %v363
        %v387 = vunpack.c.h.b16 %v363
        %v388 = vpack.c.b16 %v372, %v372
        %v389 = vpack.c.b16 %v373, %v373
        %v390 = vpack.c.b16 %v374, %v374
        %v391 = vpack.c.b16 %v375, %v375
        %v392 = vpack.c.b16 %v376, %v376
        %v393 = vpack.c.b16 %v377, %v377
        %v394 = vpack.c.b16 %v378, %v378
        %v395 = vpack.c.b16 %v379, %v379
        %v396 = vpack.c.b16 %v380, %v380
        %v397 = vpack.c.b16 %v381, %v381
        %v398 = vpack.c.b16 %v382, %v382
        %v399 = vpack.c.b16 %v383, %v383
        %v400 = vpack.c.b16 %v384, %v384
        %v401 = vpack.c.b16 %v385, %v385
        %v402 = vpack.c.b16 %v386, %v386
        %v403 = vpack.c.b16 %v387, %v387
        %vm420 = vcmask 60416
        %421 = vst.msk [vmem:[#allocation3] sm:$0xf] %vm420, %v388
        %422 = vst.msk [vmem:[#allocation3 + $0x4] sm:$0xf] %vm420, %v389
        %423 = vst.msk [vmem:[#allocation3 + $0x8] sm:$0xf] %vm420, %v390
        %424 = vst.msk [vmem:[#allocation3 + $0xc] sm:$0xf] %vm420, %v391
        %425 = vst.msk [vmem:[#allocation3 + $0x10] sm:$0xf] %vm420, %v392
        %426 = vst.msk [vmem:[#allocation3 + $0x14] sm:$0xf] %vm420, %v393
        %427 = vst.msk [vmem:[#allocation3 + $0x18] sm:$0xf] %vm420, %v394
        %428 = vst.msk [vmem:[#allocation3 + $0x1c] sm:$0xf] %vm420, %v395
        %429 = vst.msk [vmem:[#allocation3 + $0x20] sm:$0xf] %vm420, %v396
        %430 = vst.msk [vmem:[#allocation3 + $0x24] sm:$0xf] %vm420, %v397
        %431 = vst.msk [vmem:[#allocation3 + $0x28] sm:$0xf] %vm420, %v398
        %432 = vst.msk [vmem:[#allocation3 + $0x2c] sm:$0xf] %vm420, %v399
        %433 = vst.msk [vmem:[#allocation3 + $0x30] sm:$0xf] %vm420, %v400
        %434 = vst.msk [vmem:[#allocation3 + $0x34] sm:$0xf] %vm420, %v401
        %435 = vst.msk [vmem:[#allocation3 + $0x38] sm:$0xf] %vm420, %v402
        %436 = vst.msk [vmem:[#allocation3 + $0x3c] sm:$0xf] %vm420, %v403
        %v437 = vld [vmem:[%s339 + $0x1] sm:$0xff]
        %v438 = vld [vmem:[%s339 + $0x9] sm:$0xff]
        %v439 = vld [vmem:[%s339 + $0x19] sm:$0xff]
        %v440 = vld [vmem:[%s339 + $0x21] sm:$0xff]
        %v441 = vld [vmem:[%s339 + $0x31] sm:$0xff]
        %v442 = vld [vmem:[%s339 + $0x39] sm:$0xff]
        %v443 = vld [vmem:[%s339 + $0x49] sm:$0xff]
        %v444 = vld [vmem:[%s339 + $0x51] sm:$0xff]
        %v445 = vld [vmem:[%s339 + $0x61] sm:$0xff]
        %v446 = vld [vmem:[%s339 + $0x69] sm:$0xff]
        %v447 = vld [vmem:[%s339 + $0x79] sm:$0xff]
        %v448 = vld [vmem:[%s339 + $0x81] sm:$0xff]
        %v449 = vld [vmem:[%s339 + $0x91] sm:$0xff]
        %v450 = vld [vmem:[%s339 + $0x99] sm:$0xff]
        %v451 = vld [vmem:[%s339 + $0xa9] sm:$0xff]
        %v452 = vld [vmem:[%s339 + $0xb1] sm:$0xff]
        %v453 = vpack.c.bf16 %v438, %v437
        %v454 = vpack.c.bf16 %v440, %v439
        %v455 = vpack.c.bf16 %v442, %v441
        %v456 = vpack.c.bf16 %v444, %v443
        %v457 = vpack.c.bf16 %v446, %v445
        %v458 = vpack.c.bf16 %v448, %v447
        %v459 = vpack.c.bf16 %v450, %v449
        %v460 = vpack.c.bf16 %v452, %v451
        %v469 = vunpack.c.l.b16 %v453
        %v470 = vunpack.c.h.b16 %v453
        %v471 = vunpack.c.l.b16 %v454
        %v472 = vunpack.c.h.b16 %v454
        %v473 = vunpack.c.l.b16 %v455
        %v474 = vunpack.c.h.b16 %v455
        %v475 = vunpack.c.l.b16 %v456
        %v476 = vunpack.c.h.b16 %v456
        %v477 = vunpack.c.l.b16 %v457
        %v478 = vunpack.c.h.b16 %v457
        %v479 = vunpack.c.l.b16 %v458
        %v480 = vunpack.c.h.b16 %v458
        %v481 = vunpack.c.l.b16 %v459
        %v482 = vunpack.c.h.b16 %v459
        %v483 = vunpack.c.l.b16 %v460
        %v484 = vunpack.c.h.b16 %v460
        %v485 = vpack.c.b16 %v469, %v469
        %v486 = vpack.c.b16 %v470, %v470
        %v487 = vpack.c.b16 %v471, %v471
        %v488 = vpack.c.b16 %v472, %v472
        %v489 = vpack.c.b16 %v473, %v473
        %v490 = vpack.c.b16 %v474, %v474
        %v491 = vpack.c.b16 %v475, %v475
        %v492 = vpack.c.b16 %v476, %v476
        %v493 = vpack.c.b16 %v477, %v477
        %v494 = vpack.c.b16 %v478, %v478
        %v495 = vpack.c.b16 %v479, %v479
        %v496 = vpack.c.b16 %v480, %v480
        %v497 = vpack.c.b16 %v481, %v481
        %v498 = vpack.c.b16 %v482, %v482
        %v499 = vpack.c.b16 %v483, %v483
        %v500 = vpack.c.b16 %v484, %v484
        %501 = vrot.lane.b32.xlu0 %v485, 8
        %v502 = vpop.permute.xlu0 %501
        %503 = vrot.lane.b32.xlu0 %v486, 8
        %v504 = vpop.permute.xlu0 %503
        %505 = vrot.lane.b32.xlu0 %v487, 8
        %v506 = vpop.permute.xlu0 %505
        %507 = vrot.lane.b32.xlu0 %v488, 8
        %v508 = vpop.permute.xlu0 %507
        %509 = vrot.lane.b32.xlu0 %v489, 8
        %v510 = vpop.permute.xlu0 %509
        %511 = vrot.lane.b32.xlu0 %v490, 8
        %v512 = vpop.permute.xlu0 %511
        %513 = vrot.lane.b32.xlu0 %v491, 8
        %v514 = vpop.permute.xlu0 %513
        %515 = vrot.lane.b32.xlu0 %v492, 8
        %v516 = vpop.permute.xlu0 %515
        %517 = vrot.lane.b32.xlu0 %v493, 8
        %v518 = vpop.permute.xlu0 %517
        %519 = vrot.lane.b32.xlu0 %v494, 8
        %v520 = vpop.permute.xlu0 %519
        %521 = vrot.lane.b32.xlu0 %v495, 8
        %v522 = vpop.permute.xlu0 %521
        %523 = vrot.lane.b32.xlu0 %v496, 8
        %v524 = vpop.permute.xlu0 %523
        %525 = vrot.lane.b32.xlu0 %v497, 8
        %v526 = vpop.permute.xlu0 %525
        %527 = vrot.lane.b32.xlu0 %v498, 8
        %v528 = vpop.permute.xlu0 %527
        %529 = vrot.lane.b32.xlu0 %v499, 8
        %v530 = vpop.permute.xlu0 %529
        %531 = vrot.lane.b32.xlu0 %v500, 8
        %v532 = vpop.permute.xlu0 %531
        %vm549 = vcmask 126016
        %550 = vst.msk [vmem:[#allocation3] sm:$0xf] %vm549, %v502
        %551 = vst.msk [vmem:[#allocation3 + $0x4] sm:$0xf] %vm549, %v504
        %552 = vst.msk [vmem:[#allocation3 + $0x8] sm:$0xf] %vm549, %v506
        %553 = vst.msk [vmem:[#allocation3 + $0xc] sm:$0xf] %vm549, %v508
        %554 = vst.msk [vmem:[#allocation3 + $0x10] sm:$0xf] %vm549, %v510
        %555 = vst.msk [vmem:[#allocation3 + $0x14] sm:$0xf] %vm549, %v512
        %556 = vst.msk [vmem:[#allocation3 + $0x18] sm:$0xf] %vm549, %v514
        %557 = vst.msk [vmem:[#allocation3 + $0x1c] sm:$0xf] %vm549, %v516
        %558 = vst.msk [vmem:[#allocation3 + $0x20] sm:$0xf] %vm549, %v518
        %559 = vst.msk [vmem:[#allocation3 + $0x24] sm:$0xf] %vm549, %v520
        %560 = vst.msk [vmem:[#allocation3 + $0x28] sm:$0xf] %vm549, %v522
        %561 = vst.msk [vmem:[#allocation3 + $0x2c] sm:$0xf] %vm549, %v524
        %562 = vst.msk [vmem:[#allocation3 + $0x30] sm:$0xf] %vm549, %v526
        %563 = vst.msk [vmem:[#allocation3 + $0x34] sm:$0xf] %vm549, %v528
        %564 = vst.msk [vmem:[#allocation3 + $0x38] sm:$0xf] %vm549, %v530
        %565 = vst.msk [vmem:[#allocation3 + $0x3c] sm:$0xf] %vm549, %v532
        %v566 = vld [vmem:[%s339 + $0x2] sm:$0xff]
        %v567 = vld [vmem:[%s339 + $0xa] sm:$0xff]
        %v568 = vld [vmem:[%s339 + $0x1a] sm:$0xff]
        %v569 = vld [vmem:[%s339 + $0x22] sm:$0xff]
        %v570 = vld [vmem:[%s339 + $0x32] sm:$0xff]
        %v571 = vld [vmem:[%s339 + $0x3a] sm:$0xff]
        %v572 = vld [vmem:[%s339 + $0x4a] sm:$0xff]
        %v573 = vld [vmem:[%s339 + $0x52] sm:$0xff]
        %v574 = vld [vmem:[%s339 + $0x62] sm:$0xff]
        %v575 = vld [vmem:[%s339 + $0x6a] sm:$0xff]
        %v576 = vld [vmem:[%s339 + $0x7a] sm:$0xff]
        %v577 = vld [vmem:[%s339 + $0x82] sm:$0xff]
        %v578 = vld [vmem:[%s339 + $0x92] sm:$0xff]
        %v579 = vld [vmem:[%s339 + $0x9a] sm:$0xff]
        %v580 = vld [vmem:[%s339 + $0xaa] sm:$0xff]
        %v581 = vld [vmem:[%s339 + $0xb2] sm:$0xff]
        %v582 = vpack.c.bf16 %v567, %v566
        %v583 = vpack.c.bf16 %v569, %v568
        %v584 = vpack.c.bf16 %v571, %v570
        %v585 = vpack.c.bf16 %v573, %v572
        %v586 = vpack.c.bf16 %v575, %v574
        %v587 = vpack.c.bf16 %v577, %v576
        %v588 = vpack.c.bf16 %v579, %v578
        %v589 = vpack.c.bf16 %v581, %v580
        %v598 = vunpack.c.l.b16 %v582
        %v599 = vunpack.c.h.b16 %v582
        %v600 = vunpack.c.l.b16 %v583
        %v601 = vunpack.c.h.b16 %v583
        %v602 = vunpack.c.l.b16 %v584
        %v603 = vunpack.c.h.b16 %v584
        %v604 = vunpack.c.l.b16 %v585
        %v605 = vunpack.c.h.b16 %v585
        %v606 = vunpack.c.l.b16 %v586
        %v607 = vunpack.c.h.b16 %v586
        %v608 = vunpack.c.l.b16 %v587
        %v609 = vunpack.c.h.b16 %v587
        %v610 = vunpack.c.l.b16 %v588
        %v611 = vunpack.c.h.b16 %v588
        %v612 = vunpack.c.l.b16 %v589
        %v613 = vunpack.c.h.b16 %v589
        %v614 = vpack.c.b16 %v598, %v598
        %v615 = vpack.c.b16 %v599, %v599
        %v616 = vpack.c.b16 %v600, %v600
        %v617 = vpack.c.b16 %v601, %v601
        %v618 = vpack.c.b16 %v602, %v602
        %v619 = vpack.c.b16 %v603, %v603
        %v620 = vpack.c.b16 %v604, %v604
        %v621 = vpack.c.b16 %v605, %v605
        %v622 = vpack.c.b16 %v606, %v606
        %v623 = vpack.c.b16 %v607, %v607
        %v624 = vpack.c.b16 %v608, %v608
        %v625 = vpack.c.b16 %v609, %v609
        %v626 = vpack.c.b16 %v610, %v610
        %v627 = vpack.c.b16 %v611, %v611
        %v628 = vpack.c.b16 %v612, %v612
        %v629 = vpack.c.b16 %v613, %v613
        %630 = vrot.lane.b32.xlu0 %v614, 16
        %v631 = vpop.permute.xlu0 %630
        %632 = vrot.lane.b32.xlu0 %v615, 16
        %v633 = vpop.permute.xlu0 %632
        %634 = vrot.lane.b32.xlu0 %v616, 16
        %v635 = vpop.permute.xlu0 %634
        %636 = vrot.lane.b32.xlu0 %v617, 16
        %v637 = vpop.permute.xlu0 %636
        %638 = vrot.lane.b32.xlu0 %v618, 16
        %v639 = vpop.permute.xlu0 %638
        %640 = vrot.lane.b32.xlu0 %v619, 16
        %v641 = vpop.permute.xlu0 %640
        %642 = vrot.lane.b32.xlu0 %v620, 16
        %v643 = vpop.permute.xlu0 %642
        %644 = vrot.lane.b32.xlu0 %v621, 16
        %v645 = vpop.permute.xlu0 %644
        %646 = vrot.lane.b32.xlu0 %v622, 16
        %v647 = vpop.permute.xlu0 %646
        %648 = vrot.lane.b32.xlu0 %v623, 16
        %v649 = vpop.permute.xlu0 %648
        %650 = vrot.lane.b32.xlu0 %v624, 16
        %v651 = vpop.permute.xlu0 %650
        %652 = vrot.lane.b32.xlu0 %v625, 16
        %v653 = vpop.permute.xlu0 %652
        %654 = vrot.lane.b32.xlu0 %v626, 16
        %v655 = vpop.permute.xlu0 %654
        %656 = vrot.lane.b32.xlu0 %v627, 16
        %v657 = vpop.permute.xlu0 %656
        %658 = vrot.lane.b32.xlu0 %v628, 16
        %v659 = vpop.permute.xlu0 %658
        %660 = vrot.lane.b32.xlu0 %v629, 16
        %v661 = vpop.permute.xlu0 %660
        %vm678 = vcmask 191616
        %679 = vst.msk [vmem:[#allocation3] sm:$0xf] %vm678, %v631
        %680 = vst.msk [vmem:[#allocation3 + $0x4] sm:$0xf] %vm678, %v633
        %681 = vst.msk [vmem:[#allocation3 + $0x8] sm:$0xf] %vm678, %v635
        %682 = vst.msk [vmem:[#allocation3 + $0xc] sm:$0xf] %vm678, %v637
        %683 = vst.msk [vmem:[#allocation3 + $0x10] sm:$0xf] %vm678, %v639
        %684 = vst.msk [vmem:[#allocation3 + $0x14] sm:$0xf] %vm678, %v641
        %685 = vst.msk [vmem:[#allocation3 + $0x18] sm:$0xf] %vm678, %v643
        %686 = vst.msk [vmem:[#allocation3 + $0x1c] sm:$0xf] %vm678, %v645
        %687 = vst.msk [vmem:[#allocation3 + $0x20] sm:$0xf] %vm678, %v647
        %688 = vst.msk [vmem:[#allocation3 + $0x24] sm:$0xf] %vm678, %v649
        %689 = vst.msk [vmem:[#allocation3 + $0x28] sm:$0xf] %vm678, %v651
        %690 = vst.msk [vmem:[#allocation3 + $0x2c] sm:$0xf] %vm678, %v653
        %691 = vst.msk [vmem:[#allocation3 + $0x30] sm:$0xf] %vm678, %v655
        %692 = vst.msk [vmem:[#allocation3 + $0x34] sm:$0xf] %vm678, %v657
        %693 = vst.msk [vmem:[#allocation3 + $0x38] sm:$0xf] %vm678, %v659
        %694 = vst.msk [vmem:[#allocation3 + $0x3c] sm:$0xf] %vm678, %v661
        %s695 = sadd.s32 %s337, 1
        %s696 = smul.u32 %s695, 24
        %s697 = scalar_lea.vmem [#allocation2], %s696
        %v698 = vld [vmem:[%s697] sm:$0xff]
        %v699 = vld [vmem:[%s697 + $0x8] sm:$0xff]
        %v700 = vld [vmem:[%s697 + $0x18] sm:$0xff]
        %v701 = vld [vmem:[%s697 + $0x20] sm:$0xff]
        %v702 = vld [vmem:[%s697 + $0x30] sm:$0xff]
        %v703 = vld [vmem:[%s697 + $0x38] sm:$0xff]
        %v704 = vld [vmem:[%s697 + $0x48] sm:$0xff]
        %v705 = vld [vmem:[%s697 + $0x50] sm:$0xff]
        %v706 = vld [vmem:[%s697 + $0x60] sm:$0xff]
        %v707 = vld [vmem:[%s697 + $0x68] sm:$0xff]
        %v708 = vld [vmem:[%s697 + $0x78] sm:$0xff]
        %v709 = vld [vmem:[%s697 + $0x80] sm:$0xff]
        %v710 = vld [vmem:[%s697 + $0x90] sm:$0xff]
        %v711 = vld [vmem:[%s697 + $0x98] sm:$0xff]
        %v712 = vld [vmem:[%s697 + $0xa8] sm:$0xff]
        %v713 = vld [vmem:[%s697 + $0xb0] sm:$0xff]
        %v714 = vpack.c.bf16 %v699, %v698
        %v715 = vpack.c.bf16 %v701, %v700
        %v716 = vpack.c.bf16 %v703, %v702
        %v717 = vpack.c.bf16 %v705, %v704
        %v718 = vpack.c.bf16 %v707, %v706
        %v719 = vpack.c.bf16 %v709, %v708
        %v720 = vpack.c.bf16 %v711, %v710
        %v721 = vpack.c.bf16 %v713, %v712
        %v730 = vunpack.c.l.b16 %v714
        %v731 = vunpack.c.h.b16 %v714
        %v732 = vunpack.c.l.b16 %v715
        %v733 = vunpack.c.h.b16 %v715
        %v734 = vunpack.c.l.b16 %v716
        %v735 = vunpack.c.h.b16 %v716
        %v736 = vunpack.c.l.b16 %v717
        %v737 = vunpack.c.h.b16 %v717
        %v738 = vunpack.c.l.b16 %v718
        %v739 = vunpack.c.h.b16 %v718
        %v740 = vunpack.c.l.b16 %v719
        %v741 = vunpack.c.h.b16 %v719
        %v742 = vunpack.c.l.b16 %v720
        %v743 = vunpack.c.h.b16 %v720
        %v744 = vunpack.c.l.b16 %v721
        %v745 = vunpack.c.h.b16 %v721
        %v746 = vpack.c.b16 %v730, %v730
        %v747 = vpack.c.b16 %v731, %v731
        %v748 = vpack.c.b16 %v732, %v732
        %v749 = vpack.c.b16 %v733, %v733
        %v750 = vpack.c.b16 %v734, %v734
        %v751 = vpack.c.b16 %v735, %v735
        %v752 = vpack.c.b16 %v736, %v736
        %v753 = vpack.c.b16 %v737, %v737
        %v754 = vpack.c.b16 %v738, %v738
        %v755 = vpack.c.b16 %v739, %v739
        %v756 = vpack.c.b16 %v740, %v740
        %v757 = vpack.c.b16 %v741, %v741
        %v758 = vpack.c.b16 %v742, %v742
        %v759 = vpack.c.b16 %v743, %v743
        %v760 = vpack.c.b16 %v744, %v744
        %v761 = vpack.c.b16 %v745, %v745
        %762 = vrot.lane.b32.xlu0 %v746, 24
        %v763 = vpop.permute.xlu0 %762
        %764 = vrot.lane.b32.xlu0 %v747, 24
        %v765 = vpop.permute.xlu0 %764
        %766 = vrot.lane.b32.xlu0 %v748, 24
        %v767 = vpop.permute.xlu0 %766
        %768 = vrot.lane.b32.xlu0 %v749, 24
        %v769 = vpop.permute.xlu0 %768
        %770 = vrot.lane.b32.xlu0 %v750, 24
        %v771 = vpop.permute.xlu0 %770
        %772 = vrot.lane.b32.xlu0 %v751, 24
        %v773 = vpop.permute.xlu0 %772
        %774 = vrot.lane.b32.xlu0 %v752, 24
        %v775 = vpop.permute.xlu0 %774
        %776 = vrot.lane.b32.xlu0 %v753, 24
        %v777 = vpop.permute.xlu0 %776
        %778 = vrot.lane.b32.xlu0 %v754, 24
        %v779 = vpop.permute.xlu0 %778
        %780 = vrot.lane.b32.xlu0 %v755, 24
        %v781 = vpop.permute.xlu0 %780
        %782 = vrot.lane.b32.xlu0 %v756, 24
        %v783 = vpop.permute.xlu0 %782
        %784 = vrot.lane.b32.xlu0 %v757, 24
        %v785 = vpop.permute.xlu0 %784
        %786 = vrot.lane.b32.xlu0 %v758, 24
        %v787 = vpop.permute.xlu0 %786
        %788 = vrot.lane.b32.xlu0 %v759, 24
        %v789 = vpop.permute.xlu0 %788
        %790 = vrot.lane.b32.xlu0 %v760, 24
        %v791 = vpop.permute.xlu0 %790
        %792 = vrot.lane.b32.xlu0 %v761, 24
        %v793 = vpop.permute.xlu0 %792
        %vm810 = vcmask 257216
        %811 = vst.msk [vmem:[#allocation3] sm:$0xf] %vm810, %v763
        %812 = vst.msk [vmem:[#allocation3 + $0x4] sm:$0xf] %vm810, %v765
        %813 = vst.msk [vmem:[#allocation3 + $0x8] sm:$0xf] %vm810, %v767
        %814 = vst.msk [vmem:[#allocation3 + $0xc] sm:$0xf] %vm810, %v769
        %815 = vst.msk [vmem:[#allocation3 + $0x10] sm:$0xf] %vm810, %v771
        %816 = vst.msk [vmem:[#allocation3 + $0x14] sm:$0xf] %vm810, %v773
        %817 = vst.msk [vmem:[#allocation3 + $0x18] sm:$0xf] %vm810, %v775
        %818 = vst.msk [vmem:[#allocation3 + $0x1c] sm:$0xf] %vm810, %v777
        %819 = vst.msk [vmem:[#allocation3 + $0x20] sm:$0xf] %vm810, %v779
        %820 = vst.msk [vmem:[#allocation3 + $0x24] sm:$0xf] %vm810, %v781
        %821 = vst.msk [vmem:[#allocation3 + $0x28] sm:$0xf] %vm810, %v783
        %822 = vst.msk [vmem:[#allocation3 + $0x2c] sm:$0xf] %vm810, %v785
        %823 = vst.msk [vmem:[#allocation3 + $0x30] sm:$0xf] %vm810, %v787
        %824 = vst.msk [vmem:[#allocation3 + $0x34] sm:$0xf] %vm810, %v789
        %825 = vst.msk [vmem:[#allocation3 + $0x38] sm:$0xf] %vm810, %v791
        %826 = vst.msk [vmem:[#allocation3 + $0x3c] sm:$0xf] %vm810, %v793
        %v827 = vld [vmem:[%s697 + $0x1] sm:$0xff]
        %v828 = vld [vmem:[%s697 + $0x9] sm:$0xff]
        %v829 = vld [vmem:[%s697 + $0x19] sm:$0xff]
        %v830 = vld [vmem:[%s697 + $0x21] sm:$0xff]
        %v831 = vld [vmem:[%s697 + $0x31] sm:$0xff]
        %v832 = vld [vmem:[%s697 + $0x39] sm:$0xff]
        %v833 = vld [vmem:[%s697 + $0x49] sm:$0xff]
        %v834 = vld [vmem:[%s697 + $0x51] sm:$0xff]
        %v835 = vld [vmem:[%s697 + $0x61] sm:$0xff]
        %v836 = vld [vmem:[%s697 + $0x69] sm:$0xff]
        %v837 = vld [vmem:[%s697 + $0x79] sm:$0xff]
        %v838 = vld [vmem:[%s697 + $0x81] sm:$0xff]
        %v839 = vld [vmem:[%s697 + $0x91] sm:$0xff]
        %v840 = vld [vmem:[%s697 + $0x99] sm:$0xff]
        %v841 = vld [vmem:[%s697 + $0xa9] sm:$0xff]
        %v842 = vld [vmem:[%s697 + $0xb1] sm:$0xff]
        %v843 = vpack.c.bf16 %v828, %v827
        %v844 = vpack.c.bf16 %v830, %v829
        %v845 = vpack.c.bf16 %v832, %v831
        %v846 = vpack.c.bf16 %v834, %v833
        %v847 = vpack.c.bf16 %v836, %v835
        %v848 = vpack.c.bf16 %v838, %v837
        %v849 = vpack.c.bf16 %v840, %v839
        %v850 = vpack.c.bf16 %v842, %v841
        %v859 = vunpack.c.l.b16 %v843
        %v860 = vunpack.c.h.b16 %v843
        %v861 = vunpack.c.l.b16 %v844
        %v862 = vunpack.c.h.b16 %v844
        %v863 = vunpack.c.l.b16 %v845
        %v864 = vunpack.c.h.b16 %v845
        %v865 = vunpack.c.l.b16 %v846
        %v866 = vunpack.c.h.b16 %v846
        %v867 = vunpack.c.l.b16 %v847
        %v868 = vunpack.c.h.b16 %v847
        %v869 = vunpack.c.l.b16 %v848
        %v870 = vunpack.c.h.b16 %v848
        %v871 = vunpack.c.l.b16 %v849
        %v872 = vunpack.c.h.b16 %v849
        %v873 = vunpack.c.l.b16 %v850
        %v874 = vunpack.c.h.b16 %v850
        %v875 = vpack.c.b16 %v859, %v859
        %v876 = vpack.c.b16 %v860, %v860
        %v877 = vpack.c.b16 %v861, %v861
        %v878 = vpack.c.b16 %v862, %v862
        %v879 = vpack.c.b16 %v863, %v863
        %v880 = vpack.c.b16 %v864, %v864
        %v881 = vpack.c.b16 %v865, %v865
        %v882 = vpack.c.b16 %v866, %v866
        %v883 = vpack.c.b16 %v867, %v867
        %v884 = vpack.c.b16 %v868, %v868
        %v885 = vpack.c.b16 %v869, %v869
        %v886 = vpack.c.b16 %v870, %v870
        %v887 = vpack.c.b16 %v871, %v871
        %v888 = vpack.c.b16 %v872, %v872
        %v889 = vpack.c.b16 %v873, %v873
        %v890 = vpack.c.b16 %v874, %v874
        %891 = vrot.lane.b32.xlu0 %v875, 32
        %v892 = vpop.permute.xlu0 %891
        %893 = vrot.lane.b32.xlu0 %v876, 32
        %v894 = vpop.permute.xlu0 %893
        %895 = vrot.lane.b32.xlu0 %v877, 32
        %v896 = vpop.permute.xlu0 %895
        %897 = vrot.lane.b32.xlu0 %v878, 32
        %v898 = vpop.permute.xlu0 %897
        %899 = vrot.lane.b32.xlu0 %v879, 32
        %v900 = vpop.permute.xlu0 %899
        %901 = vrot.lane.b32.xlu0 %v880, 32
        %v902 = vpop.permute.xlu0 %901
        %903 = vrot.lane.b32.xlu0 %v881, 32
        %v904 = vpop.permute.xlu0 %903
        %905 = vrot.lane.b32.xlu0 %v882, 32
        %v906 = vpop.permute.xlu0 %905
        %907 = vrot.lane.b32.xlu0 %v883, 32
        %v908 = vpop.permute.xlu0 %907
        %909 = vrot.lane.b32.xlu0 %v884, 32
        %v910 = vpop.permute.xlu0 %909
        %911 = vrot.lane.b32.xlu0 %v885, 32
        %v912 = vpop.permute.xlu0 %911
        %913 = vrot.lane.b32.xlu0 %v886, 32
        %v914 = vpop.permute.xlu0 %913
        %915 = vrot.lane.b32.xlu0 %v887, 32
        %v916 = vpop.permute.xlu0 %915
        %917 = vrot.lane.b32.xlu0 %v888, 32
        %v918 = vpop.permute.xlu0 %917
        %919 = vrot.lane.b32.xlu0 %v889, 32
        %v920 = vpop.permute.xlu0 %919
        %921 = vrot.lane.b32.xlu0 %v890, 32
        %v922 = vpop.permute.xlu0 %921
        %vm939 = vcmask 322816
        %940 = vst.msk [vmem:[#allocation3] sm:$0xf] %vm939, %v892
        %941 = vst.msk [vmem:[#allocation3 + $0x4] sm:$0xf] %vm939, %v894
        %942 = vst.msk [vmem:[#allocation3 + $0x8] sm:$0xf] %vm939, %v896
        %943 = vst.msk [vmem:[#allocation3 + $0xc] sm:$0xf] %vm939, %v898
        %944 = vst.msk [vmem:[#allocation3 + $0x10] sm:$0xf] %vm939, %v900
        %945 = vst.msk [vmem:[#allocation3 + $0x14] sm:$0xf] %vm939, %v902
        %946 = vst.msk [vmem:[#allocation3 + $0x18] sm:$0xf] %vm939, %v904
        %947 = vst.msk [vmem:[#allocation3 + $0x1c] sm:$0xf] %vm939, %v906
        %948 = vst.msk [vmem:[#allocation3 + $0x20] sm:$0xf] %vm939, %v908
        %949 = vst.msk [vmem:[#allocation3 + $0x24] sm:$0xf] %vm939, %v910
        %950 = vst.msk [vmem:[#allocation3 + $0x28] sm:$0xf] %vm939, %v912
        %951 = vst.msk [vmem:[#allocation3 + $0x2c] sm:$0xf] %vm939, %v914
        %952 = vst.msk [vmem:[#allocation3 + $0x30] sm:$0xf] %vm939, %v916
        %953 = vst.msk [vmem:[#allocation3 + $0x34] sm:$0xf] %vm939, %v918
        %954 = vst.msk [vmem:[#allocation3 + $0x38] sm:$0xf] %vm939, %v920
        %955 = vst.msk [vmem:[#allocation3 + $0x3c] sm:$0xf] %vm939, %v922
        %v956 = vld [vmem:[%s697 + $0x2] sm:$0xff]
        %v957 = vld [vmem:[%s697 + $0xa] sm:$0xff]
        %v958 = vld [vmem:[%s697 + $0x1a] sm:$0xff]
        %v959 = vld [vmem:[%s697 + $0x22] sm:$0xff]
        %v960 = vld [vmem:[%s697 + $0x32] sm:$0xff]
        %v961 = vld [vmem:[%s697 + $0x3a] sm:$0xff]
        %v962 = vld [vmem:[%s697 + $0x4a] sm:$0xff]
        %v963 = vld [vmem:[%s697 + $0x52] sm:$0xff]
        %v964 = vld [vmem:[%s697 + $0x62] sm:$0xff]
        %v965 = vld [vmem:[%s697 + $0x6a] sm:$0xff]
        %v966 = vld [vmem:[%s697 + $0x7a] sm:$0xff]
        %v967 = vld [vmem:[%s697 + $0x82] sm:$0xff]
        %v968 = vld [vmem:[%s697 + $0x92] sm:$0xff]
        %v969 = vld [vmem:[%s697 + $0x9a] sm:$0xff]
        %v970 = vld [vmem:[%s697 + $0xaa] sm:$0xff]
        %v971 = vld [vmem:[%s697 + $0xb2] sm:$0xff]
        %v972 = vpack.c.bf16 %v957, %v956
        %v973 = vpack.c.bf16 %v959, %v958
        %v974 = vpack.c.bf16 %v961, %v960
        %v975 = vpack.c.bf16 %v963, %v962
        %v976 = vpack.c.bf16 %v965, %v964
        %v977 = vpack.c.bf16 %v967, %v966
        %v978 = vpack.c.bf16 %v969, %v968
        %v979 = vpack.c.bf16 %v971, %v970
        %v988 = vunpack.c.l.b16 %v972
        %v989 = vunpack.c.h.b16 %v972
        %v990 = vunpack.c.l.b16 %v973
        %v991 = vunpack.c.h.b16 %v973
        %v992 = vunpack.c.l.b16 %v974
        %v993 = vunpack.c.h.b16 %v974
        %v994 = vunpack.c.l.b16 %v975
        %v995 = vunpack.c.h.b16 %v975
        %v996 = vunpack.c.l.b16 %v976
        %v997 = vunpack.c.h.b16 %v976
        %v998 = vunpack.c.l.b16 %v977
        %v999 = vunpack.c.h.b16 %v977
        %v1000 = vunpack.c.l.b16 %v978
        %v1001 = vunpack.c.h.b16 %v978
        %v1002 = vunpack.c.l.b16 %v979
        %v1003 = vunpack.c.h.b16 %v979
        %v1004 = vpack.c.b16 %v988, %v988
        %v1005 = vpack.c.b16 %v989, %v989
        %v1006 = vpack.c.b16 %v990, %v990
        %v1007 = vpack.c.b16 %v991, %v991
        %v1008 = vpack.c.b16 %v992, %v992
        %v1009 = vpack.c.b16 %v993, %v993
        %v1010 = vpack.c.b16 %v994, %v994
        %v1011 = vpack.c.b16 %v995, %v995
        %v1012 = vpack.c.b16 %v996, %v996
        %v1013 = vpack.c.b16 %v997, %v997
        %v1014 = vpack.c.b16 %v998, %v998
        %v1015 = vpack.c.b16 %v999, %v999
        %v1016 = vpack.c.b16 %v1000, %v1000
        %v1017 = vpack.c.b16 %v1001, %v1001
        %v1018 = vpack.c.b16 %v1002, %v1002
        %v1019 = vpack.c.b16 %v1003, %v1003
        %1020 = vrot.lane.b32.xlu0 %v1004, 40
        %v1021 = vpop.permute.xlu0 %1020
        %1022 = vrot.lane.b32.xlu0 %v1005, 40
        %v1023 = vpop.permute.xlu0 %1022
        %1024 = vrot.lane.b32.xlu0 %v1006, 40
        %v1025 = vpop.permute.xlu0 %1024
        %1026 = vrot.lane.b32.xlu0 %v1007, 40
        %v1027 = vpop.permute.xlu0 %1026
        %1028 = vrot.lane.b32.xlu0 %v1008, 40
        %v1029 = vpop.permute.xlu0 %1028
        %1030 = vrot.lane.b32.xlu0 %v1009, 40
        %v1031 = vpop.permute.xlu0 %1030
        %1032 = vrot.lane.b32.xlu0 %v1010, 40
        %v1033 = vpop.permute.xlu0 %1032
        %1034 = vrot.lane.b32.xlu0 %v1011, 40
        %v1035 = vpop.permute.xlu0 %1034
        %1036 = vrot.lane.b32.xlu0 %v1012, 40
        %v1037 = vpop.permute.xlu0 %1036
        %1038 = vrot.lane.b32.xlu0 %v1013, 40
        %v1039 = vpop.permute.xlu0 %1038
        %1040 = vrot.lane.b32.xlu0 %v1014, 40
        %v1041 = vpop.permute.xlu0 %1040
        %1042 = vrot.lane.b32.xlu0 %v1015, 40
        %v1043 = vpop.permute.xlu0 %1042
        %1044 = vrot.lane.b32.xlu0 %v1016, 40
        %v1045 = vpop.permute.xlu0 %1044
        %1046 = vrot.lane.b32.xlu0 %v1017, 40
        %v1047 = vpop.permute.xlu0 %1046
        %1048 = vrot.lane.b32.xlu0 %v1018, 40
        %v1049 = vpop.permute.xlu0 %1048
        %1050 = vrot.lane.b32.xlu0 %v1019, 40
        %v1051 = vpop.permute.xlu0 %1050
        %vm1068 = vcmask 388416
        %1069 = vst.msk [vmem:[#allocation3] sm:$0xf] %vm1068, %v1021
        %1070 = vst.msk [vmem:[#allocation3 + $0x4] sm:$0xf] %vm1068, %v1023
        %1071 = vst.msk [vmem:[#allocation3 + $0x8] sm:$0xf] %vm1068, %v1025
        %1072 = vst.msk [vmem:[#allocation3 + $0xc] sm:$0xf] %vm1068, %v1027
        %1073 = vst.msk [vmem:[#allocation3 + $0x10] sm:$0xf] %vm1068, %v1029
        %1074 = vst.msk [vmem:[#allocation3 + $0x14] sm:$0xf] %vm1068, %v1031
        %1075 = vst.msk [vmem:[#allocation3 + $0x18] sm:$0xf] %vm1068, %v1033
        %1076 = vst.msk [vmem:[#allocation3 + $0x1c] sm:$0xf] %vm1068, %v1035
        %1077 = vst.msk [vmem:[#allocation3 + $0x20] sm:$0xf] %vm1068, %v1037
        %1078 = vst.msk [vmem:[#allocation3 + $0x24] sm:$0xf] %vm1068, %v1039
        %1079 = vst.msk [vmem:[#allocation3 + $0x28] sm:$0xf] %vm1068, %v1041
        %1080 = vst.msk [vmem:[#allocation3 + $0x2c] sm:$0xf] %vm1068, %v1043
        %1081 = vst.msk [vmem:[#allocation3 + $0x30] sm:$0xf] %vm1068, %v1045
        %1082 = vst.msk [vmem:[#allocation3 + $0x34] sm:$0xf] %vm1068, %v1047
        %1083 = vst.msk [vmem:[#allocation3 + $0x38] sm:$0xf] %vm1068, %v1049
        %1084 = vst.msk [vmem:[#allocation3 + $0x3c] sm:$0xf] %vm1068, %v1051
        %s1085 = sadd.s32 %s337, 2
        %s1086 = smul.u32 %s1085, 24
        %s1087 = scalar_lea.vmem [#allocation2], %s1086
        %v1088 = vld [vmem:[%s1087] sm:$0xff]
        %v1089 = vld [vmem:[%s1087 + $0x8] sm:$0xff]
        %v1090 = vld [vmem:[%s1087 + $0x18] sm:$0xff]
        %v1091 = vld [vmem:[%s1087 + $0x20] sm:$0xff]
        %v1092 = vld [vmem:[%s1087 + $0x30] sm:$0xff]
        %v1093 = vld [vmem:[%s1087 + $0x38] sm:$0xff]
        %v1094 = vld [vmem:[%s1087 + $0x48] sm:$0xff]
        %v1095 = vld [vmem:[%s1087 + $0x50] sm:$0xff]
        %v1096 = vld [vmem:[%s1087 + $0x60] sm:$0xff]
        %v1097 = vld [vmem:[%s1087 + $0x68] sm:$0xff]
        %v1098 = vld [vmem:[%s1087 + $0x78] sm:$0xff]
        %v1099 = vld [vmem:[%s1087 + $0x80] sm:$0xff]
        %v1100 = vld [vmem:[%s1087 + $0x90] sm:$0xff]
        %v1101 = vld [vmem:[%s1087 + $0x98] sm:$0xff]
        %v1102 = vld [vmem:[%s1087 + $0xa8] sm:$0xff]
        %v1103 = vld [vmem:[%s1087 + $0xb0] sm:$0xff]
        %v1104 = vpack.c.bf16 %v1089, %v1088
        %v1105 = vpack.c.bf16 %v1091, %v1090
        %v1106 = vpack.c.bf16 %v1093, %v1092
        %v1107 = vpack.c.bf16 %v1095, %v1094
        %v1108 = vpack.c.bf16 %v1097, %v1096
        %v1109 = vpack.c.bf16 %v1099, %v1098
        %v1110 = vpack.c.bf16 %v1101, %v1100
        %v1111 = vpack.c.bf16 %v1103, %v1102
        %v1120 = vunpack.c.l.b16 %v1104
        %v1121 = vunpack.c.h.b16 %v1104
        %v1122 = vunpack.c.l.b16 %v1105
        %v1123 = vunpack.c.h.b16 %v1105
        %v1124 = vunpack.c.l.b16 %v1106
        %v1125 = vunpack.c.h.b16 %v1106
        %v1126 = vunpack.c.l.b16 %v1107
        %v1127 = vunpack.c.h.b16 %v1107
        %v1128 = vunpack.c.l.b16 %v1108
        %v1129 = vunpack.c.h.b16 %v1108
        %v1130 = vunpack.c.l.b16 %v1109
        %v1131 = vunpack.c.h.b16 %v1109
        %v1132 = vunpack.c.l.b16 %v1110
        %v1133 = vunpack.c.h.b16 %v1110
        %v1134 = vunpack.c.l.b16 %v1111
        %v1135 = vunpack.c.h.b16 %v1111
        %v1136 = vpack.c.b16 %v1120, %v1120
        %v1137 = vpack.c.b16 %v1121, %v1121
        %v1138 = vpack.c.b16 %v1122, %v1122
        %v1139 = vpack.c.b16 %v1123, %v1123
        %v1140 = vpack.c.b16 %v1124, %v1124
        %v1141 = vpack.c.b16 %v1125, %v1125
        %v1142 = vpack.c.b16 %v1126, %v1126
        %v1143 = vpack.c.b16 %v1127, %v1127
        %v1144 = vpack.c.b16 %v1128, %v1128
        %v1145 = vpack.c.b16 %v1129, %v1129
        %v1146 = vpack.c.b16 %v1130, %v1130
        %v1147 = vpack.c.b16 %v1131, %v1131
        %v1148 = vpack.c.b16 %v1132, %v1132
        %v1149 = vpack.c.b16 %v1133, %v1133
        %v1150 = vpack.c.b16 %v1134, %v1134
        %v1151 = vpack.c.b16 %v1135, %v1135
        %1152 = vrot.lane.b32.xlu0 %v1136, 48
        %v1153 = vpop.permute.xlu0 %1152
        %1154 = vrot.lane.b32.xlu0 %v1137, 48
        %v1155 = vpop.permute.xlu0 %1154
        %1156 = vrot.lane.b32.xlu0 %v1138, 48
        %v1157 = vpop.permute.xlu0 %1156
        %1158 = vrot.lane.b32.xlu0 %v1139, 48
        %v1159 = vpop.permute.xlu0 %1158
        %1160 = vrot.lane.b32.xlu0 %v1140, 48
        %v1161 = vpop.permute.xlu0 %1160
        %1162 = vrot.lane.b32.xlu0 %v1141, 48
        %v1163 = vpop.permute.xlu0 %1162
        %1164 = vrot.lane.b32.xlu0 %v1142, 48
        %v1165 = vpop.permute.xlu0 %1164
        %1166 = vrot.lane.b32.xlu0 %v1143, 48
        %v1167 = vpop.permute.xlu0 %1166
        %1168 = vrot.lane.b32.xlu0 %v1144, 48
        %v1169 = vpop.permute.xlu0 %1168
        %1170 = vrot.lane.b32.xlu0 %v1145, 48
        %v1171 = vpop.permute.xlu0 %1170
        %1172 = vrot.lane.b32.xlu0 %v1146, 48
        %v1173 = vpop.permute.xlu0 %1172
        %1174 = vrot.lane.b32.xlu0 %v1147, 48
        %v1175 = vpop.permute.xlu0 %1174
        %1176 = vrot.lane.b32.xlu0 %v1148, 48
        %v1177 = vpop.permute.xlu0 %1176
        %1178 = vrot.lane.b32.xlu0 %v1149, 48
        %v1179 = vpop.permute.xlu0 %1178
        %1180 = vrot.lane.b32.xlu0 %v1150, 48
        %v1181 = vpop.permute.xlu0 %1180
        %1182 = vrot.lane.b32.xlu0 %v1151, 48
        %v1183 = vpop.permute.xlu0 %1182
        %vm1200 = vcmask 454016
        %1201 = vst.msk [vmem:[#allocation3] sm:$0xf] %vm1200, %v1153
        %1202 = vst.msk [vmem:[#allocation3 + $0x4] sm:$0xf] %vm1200, %v1155
        %1203 = vst.msk [vmem:[#allocation3 + $0x8] sm:$0xf] %vm1200, %v1157
        %1204 = vst.msk [vmem:[#allocation3 + $0xc] sm:$0xf] %vm1200, %v1159
        %1205 = vst.msk [vmem:[#allocation3 + $0x10] sm:$0xf] %vm1200, %v1161
        %1206 = vst.msk [vmem:[#allocation3 + $0x14] sm:$0xf] %vm1200, %v1163
        %1207 = vst.msk [vmem:[#allocation3 + $0x18] sm:$0xf] %vm1200, %v1165
        %1208 = vst.msk [vmem:[#allocation3 + $0x1c] sm:$0xf] %vm1200, %v1167
        %1209 = vst.msk [vmem:[#allocation3 + $0x20] sm:$0xf] %vm1200, %v1169
        %1210 = vst.msk [vmem:[#allocation3 + $0x24] sm:$0xf] %vm1200, %v1171
        %1211 = vst.msk [vmem:[#allocation3 + $0x28] sm:$0xf] %vm1200, %v1173
        %1212 = vst.msk [vmem:[#allocation3 + $0x2c] sm:$0xf] %vm1200, %v1175
        %1213 = vst.msk [vmem:[#allocation3 + $0x30] sm:$0xf] %vm1200, %v1177
        %1214 = vst.msk [vmem:[#allocation3 + $0x34] sm:$0xf] %vm1200, %v1179
        %1215 = vst.msk [vmem:[#allocation3 + $0x38] sm:$0xf] %vm1200, %v1181
        %1216 = vst.msk [vmem:[#allocation3 + $0x3c] sm:$0xf] %vm1200, %v1183
        %v1217 = vld [vmem:[%s1087 + $0x1] sm:$0xff]
        %v1218 = vld [vmem:[%s1087 + $0x9] sm:$0xff]
        %v1219 = vld [vmem:[%s1087 + $0x19] sm:$0xff]
        %v1220 = vld [vmem:[%s1087 + $0x21] sm:$0xff]
        %v1221 = vld [vmem:[%s1087 + $0x31] sm:$0xff]
        %v1222 = vld [vmem:[%s1087 + $0x39] sm:$0xff]
        %v1223 = vld [vmem:[%s1087 + $0x49] sm:$0xff]
        %v1224 = vld [vmem:[%s1087 + $0x51] sm:$0xff]
        %v1225 = vld [vmem:[%s1087 + $0x61] sm:$0xff]
        %v1226 = vld [vmem:[%s1087 + $0x69] sm:$0xff]
        %v1227 = vld [vmem:[%s1087 + $0x79] sm:$0xff]
        %v1228 = vld [vmem:[%s1087 + $0x81] sm:$0xff]
        %v1229 = vld [vmem:[%s1087 + $0x91] sm:$0xff]
        %v1230 = vld [vmem:[%s1087 + $0x99] sm:$0xff]
        %v1231 = vld [vmem:[%s1087 + $0xa9] sm:$0xff]
        %v1232 = vld [vmem:[%s1087 + $0xb1] sm:$0xff]
        %v1233 = vpack.c.bf16 %v1218, %v1217
        %v1234 = vpack.c.bf16 %v1220, %v1219
        %v1235 = vpack.c.bf16 %v1222, %v1221
        %v1236 = vpack.c.bf16 %v1224, %v1223
        %v1237 = vpack.c.bf16 %v1226, %v1225
        %v1238 = vpack.c.bf16 %v1228, %v1227
        %v1239 = vpack.c.bf16 %v1230, %v1229
        %v1240 = vpack.c.bf16 %v1232, %v1231
        %v1249 = vunpack.c.l.b16 %v1233
        %v1250 = vunpack.c.h.b16 %v1233
        %v1251 = vunpack.c.l.b16 %v1234
        %v1252 = vunpack.c.h.b16 %v1234
        %v1253 = vunpack.c.l.b16 %v1235
        %v1254 = vunpack.c.h.b16 %v1235
        %v1255 = vunpack.c.l.b16 %v1236
        %v1256 = vunpack.c.h.b16 %v1236
        %v1257 = vunpack.c.l.b16 %v1237
        %v1258 = vunpack.c.h.b16 %v1237
        %v1259 = vunpack.c.l.b16 %v1238
        %v1260 = vunpack.c.h.b16 %v1238
        %v1261 = vunpack.c.l.b16 %v1239
        %v1262 = vunpack.c.h.b16 %v1239
        %v1263 = vunpack.c.l.b16 %v1240
        %v1264 = vunpack.c.h.b16 %v1240
        %v1265 = vpack.c.b16 %v1249, %v1249
        %v1266 = vpack.c.b16 %v1250, %v1250
        %v1267 = vpack.c.b16 %v1251, %v1251
        %v1268 = vpack.c.b16 %v1252, %v1252
        %v1269 = vpack.c.b16 %v1253, %v1253
        %v1270 = vpack.c.b16 %v1254, %v1254
        %v1271 = vpack.c.b16 %v1255, %v1255
        %v1272 = vpack.c.b16 %v1256, %v1256
        %v1273 = vpack.c.b16 %v1257, %v1257
        %v1274 = vpack.c.b16 %v1258, %v1258
        %v1275 = vpack.c.b16 %v1259, %v1259
        %v1276 = vpack.c.b16 %v1260, %v1260
        %v1277 = vpack.c.b16 %v1261, %v1261
        %v1278 = vpack.c.b16 %v1262, %v1262
        %v1279 = vpack.c.b16 %v1263, %v1263
        %v1280 = vpack.c.b16 %v1264, %v1264
        %1281 = vrot.lane.b32.xlu0 %v1265, 56
        %v1282 = vpop.permute.xlu0 %1281
        %1283 = vrot.lane.b32.xlu0 %v1266, 56
        %v1284 = vpop.permute.xlu0 %1283
        %1285 = vrot.lane.b32.xlu0 %v1267, 56
        %v1286 = vpop.permute.xlu0 %1285
        %1287 = vrot.lane.b32.xlu0 %v1268, 56
        %v1288 = vpop.permute.xlu0 %1287
        %1289 = vrot.lane.b32.xlu0 %v1269, 56
        %v1290 = vpop.permute.xlu0 %1289
        %1291 = vrot.lane.b32.xlu0 %v1270, 56
        %v1292 = vpop.permute.xlu0 %1291
        %1293 = vrot.lane.b32.xlu0 %v1271, 56
        %v1294 = vpop.permute.xlu0 %1293
        %1295 = vrot.lane.b32.xlu0 %v1272, 56
        %v1296 = vpop.permute.xlu0 %1295
        %1297 = vrot.lane.b32.xlu0 %v1273, 56
        %v1298 = vpop.permute.xlu0 %1297
        %1299 = vrot.lane.b32.xlu0 %v1274, 56
        %v1300 = vpop.permute.xlu0 %1299
        %1301 = vrot.lane.b32.xlu0 %v1275, 56
        %v1302 = vpop.permute.xlu0 %1301
        %1303 = vrot.lane.b32.xlu0 %v1276, 56
        %v1304 = vpop.permute.xlu0 %1303
        %1305 = vrot.lane.b32.xlu0 %v1277, 56
        %v1306 = vpop.permute.xlu0 %1305
        %1307 = vrot.lane.b32.xlu0 %v1278, 56
        %v1308 = vpop.permute.xlu0 %1307
        %1309 = vrot.lane.b32.xlu0 %v1279, 56
        %v1310 = vpop.permute.xlu0 %1309
        %1311 = vrot.lane.b32.xlu0 %v1280, 56
        %v1312 = vpop.permute.xlu0 %1311
        %vm1329 = vcmask 519616
        %1330 = vst.msk [vmem:[#allocation3] sm:$0xf] %vm1329, %v1282
        %1331 = vst.msk [vmem:[#allocation3 + $0x4] sm:$0xf] %vm1329, %v1284
        %1332 = vst.msk [vmem:[#allocation3 + $0x8] sm:$0xf] %vm1329, %v1286
        %1333 = vst.msk [vmem:[#allocation3 + $0xc] sm:$0xf] %vm1329, %v1288
        %1334 = vst.msk [vmem:[#allocation3 + $0x10] sm:$0xf] %vm1329, %v1290
        %1335 = vst.msk [vmem:[#allocation3 + $0x14] sm:$0xf] %vm1329, %v1292
        %1336 = vst.msk [vmem:[#allocation3 + $0x18] sm:$0xf] %vm1329, %v1294
        %1337 = vst.msk [vmem:[#allocation3 + $0x1c] sm:$0xf] %vm1329, %v1296
        %1338 = vst.msk [vmem:[#allocation3 + $0x20] sm:$0xf] %vm1329, %v1298
        %1339 = vst.msk [vmem:[#allocation3 + $0x24] sm:$0xf] %vm1329, %v1300
        %1340 = vst.msk [vmem:[#allocation3 + $0x28] sm:$0xf] %vm1329, %v1302
        %1341 = vst.msk [vmem:[#allocation3 + $0x2c] sm:$0xf] %vm1329, %v1304
        %1342 = vst.msk [vmem:[#allocation3 + $0x30] sm:$0xf] %vm1329, %v1306
        %1343 = vst.msk [vmem:[#allocation3 + $0x34] sm:$0xf] %vm1329, %v1308
        %1344 = vst.msk [vmem:[#allocation3 + $0x38] sm:$0xf] %vm1329, %v1310
        %1345 = vst.msk [vmem:[#allocation3 + $0x3c] sm:$0xf] %vm1329, %v1312
        %v1346 = vld [vmem:[%s1087 + $0x2] sm:$0xff]
        %v1347 = vld [vmem:[%s1087 + $0xa] sm:$0xff]
        %v1348 = vld [vmem:[%s1087 + $0x1a] sm:$0xff]
        %v1349 = vld [vmem:[%s1087 + $0x22] sm:$0xff]
        %v1350 = vld [vmem:[%s1087 + $0x32] sm:$0xff]
        %v1351 = vld [vmem:[%s1087 + $0x3a] sm:$0xff]
        %v1352 = vld [vmem:[%s1087 + $0x4a] sm:$0xff]
        %v1353 = vld [vmem:[%s1087 + $0x52] sm:$0xff]
        %v1354 = vld [vmem:[%s1087 + $0x62] sm:$0xff]
        %v1355 = vld [vmem:[%s1087 + $0x6a] sm:$0xff]
        %v1356 = vld [vmem:[%s1087 + $0x7a] sm:$0xff]
        %v1357 = vld [vmem:[%s1087 + $0x82] sm:$0xff]
        %v1358 = vld [vmem:[%s1087 + $0x92] sm:$0xff]
        %v1359 = vld [vmem:[%s1087 + $0x9a] sm:$0xff]
        %v1360 = vld [vmem:[%s1087 + $0xaa] sm:$0xff]
        %v1361 = vld [vmem:[%s1087 + $0xb2] sm:$0xff]
        %v1362 = vpack.c.bf16 %v1347, %v1346
        %v1363 = vpack.c.bf16 %v1349, %v1348
        %v1364 = vpack.c.bf16 %v1351, %v1350
        %v1365 = vpack.c.bf16 %v1353, %v1352
        %v1366 = vpack.c.bf16 %v1355, %v1354
        %v1367 = vpack.c.bf16 %v1357, %v1356
        %v1368 = vpack.c.bf16 %v1359, %v1358
        %v1369 = vpack.c.bf16 %v1361, %v1360
        %v1378 = vunpack.c.l.b16 %v1362
        %v1379 = vunpack.c.h.b16 %v1362
        %v1380 = vunpack.c.l.b16 %v1363
        %v1381 = vunpack.c.h.b16 %v1363
        %v1382 = vunpack.c.l.b16 %v1364
        %v1383 = vunpack.c.h.b16 %v1364
        %v1384 = vunpack.c.l.b16 %v1365
        %v1385 = vunpack.c.h.b16 %v1365
        %v1386 = vunpack.c.l.b16 %v1366
        %v1387 = vunpack.c.h.b16 %v1366
        %v1388 = vunpack.c.l.b16 %v1367
        %v1389 = vunpack.c.h.b16 %v1367
        %v1390 = vunpack.c.l.b16 %v1368
        %v1391 = vunpack.c.h.b16 %v1368
        %v1392 = vunpack.c.l.b16 %v1369
        %v1393 = vunpack.c.h.b16 %v1369
        %v1394 = vpack.c.b16 %v1378, %v1378
        %v1395 = vpack.c.b16 %v1379, %v1379
        %v1396 = vpack.c.b16 %v1380, %v1380
        %v1397 = vpack.c.b16 %v1381, %v1381
        %v1398 = vpack.c.b16 %v1382, %v1382
        %v1399 = vpack.c.b16 %v1383, %v1383
        %v1400 = vpack.c.b16 %v1384, %v1384
        %v1401 = vpack.c.b16 %v1385, %v1385
        %v1402 = vpack.c.b16 %v1386, %v1386
        %v1403 = vpack.c.b16 %v1387, %v1387
        %v1404 = vpack.c.b16 %v1388, %v1388
        %v1405 = vpack.c.b16 %v1389, %v1389
        %v1406 = vpack.c.b16 %v1390, %v1390
        %v1407 = vpack.c.b16 %v1391, %v1391
        %v1408 = vpack.c.b16 %v1392, %v1392
        %v1409 = vpack.c.b16 %v1393, %v1393
        %1410 = vrot.lane.b32.xlu0 %v1394, 64
        %v1411 = vpop.permute.xlu0 %1410
        %1412 = vrot.lane.b32.xlu0 %v1395, 64
        %v1413 = vpop.permute.xlu0 %1412
        %1414 = vrot.lane.b32.xlu0 %v1396, 64
        %v1415 = vpop.permute.xlu0 %1414
        %1416 = vrot.lane.b32.xlu0 %v1397, 64
        %v1417 = vpop.permute.xlu0 %1416
        %1418 = vrot.lane.b32.xlu0 %v1398, 64
        %v1419 = vpop.permute.xlu0 %1418
        %1420 = vrot.lane.b32.xlu0 %v1399, 64
        %v1421 = vpop.permute.xlu0 %1420
        %1422 = vrot.lane.b32.xlu0 %v1400, 64
        %v1423 = vpop.permute.xlu0 %1422
        %1424 = vrot.lane.b32.xlu0 %v1401, 64
        %v1425 = vpop.permute.xlu0 %1424
        %1426 = vrot.lane.b32.xlu0 %v1402, 64
        %v1427 = vpop.permute.xlu0 %1426
        %1428 = vrot.lane.b32.xlu0 %v1403, 64
        %v1429 = vpop.permute.xlu0 %1428
        %1430 = vrot.lane.b32.xlu0 %v1404, 64
        %v1431 = vpop.permute.xlu0 %1430
        %1432 = vrot.lane.b32.xlu0 %v1405, 64
        %v1433 = vpop.permute.xlu0 %1432
        %1434 = vrot.lane.b32.xlu0 %v1406, 64
        %v1435 = vpop.permute.xlu0 %1434
        %1436 = vrot.lane.b32.xlu0 %v1407, 64
        %v1437 = vpop.permute.xlu0 %1436
        %1438 = vrot.lane.b32.xlu0 %v1408, 64
        %v1439 = vpop.permute.xlu0 %1438
        %1440 = vrot.lane.b32.xlu0 %v1409, 64
        %v1441 = vpop.permute.xlu0 %1440
        %vm1458 = vcmask 585216
        %1459 = vst.msk [vmem:[#allocation3] sm:$0xf] %vm1458, %v1411
        %1460 = vst.msk [vmem:[#allocation3 + $0x4] sm:$0xf] %vm1458, %v1413
        %1461 = vst.msk [vmem:[#allocation3 + $0x8] sm:$0xf] %vm1458, %v1415
        %1462 = vst.msk [vmem:[#allocation3 + $0xc] sm:$0xf] %vm1458, %v1417
        %1463 = vst.msk [vmem:[#allocation3 + $0x10] sm:$0xf] %vm1458, %v1419
        %1464 = vst.msk [vmem:[#allocation3 + $0x14] sm:$0xf] %vm1458, %v1421
        %1465 = vst.msk [vmem:[#allocation3 + $0x18] sm:$0xf] %vm1458, %v1423
        %1466 = vst.msk [vmem:[#allocation3 + $0x1c] sm:$0xf] %vm1458, %v1425
        %1467 = vst.msk [vmem:[#allocation3 + $0x20] sm:$0xf] %vm1458, %v1427
        %1468 = vst.msk [vmem:[#allocation3 + $0x24] sm:$0xf] %vm1458, %v1429
        %1469 = vst.msk [vmem:[#allocation3 + $0x28] sm:$0xf] %vm1458, %v1431
        %1470 = vst.msk [vmem:[#allocation3 + $0x2c] sm:$0xf] %vm1458, %v1433
        %1471 = vst.msk [vmem:[#allocation3 + $0x30] sm:$0xf] %vm1458, %v1435
        %1472 = vst.msk [vmem:[#allocation3 + $0x34] sm:$0xf] %vm1458, %v1437
        %1473 = vst.msk [vmem:[#allocation3 + $0x38] sm:$0xf] %vm1458, %v1439
        %1474 = vst.msk [vmem:[#allocation3 + $0x3c] sm:$0xf] %vm1458, %v1441
        %v1475 = vld [vmem:[#allocation3] sm:$0xf]
        %v1476 = vld [vmem:[#allocation3 + $0x4] sm:$0xf]
        %v1477 = vld [vmem:[#allocation3 + $0x8] sm:$0xf]
        %v1478 = vld [vmem:[#allocation3 + $0xc] sm:$0xf]
        %v1479 = vld [vmem:[#allocation3 + $0x10] sm:$0xf]
        %v1480 = vld [vmem:[#allocation3 + $0x14] sm:$0xf]
        %v1481 = vld [vmem:[#allocation3 + $0x18] sm:$0xf]
        %v1482 = vld [vmem:[#allocation3 + $0x1c] sm:$0xf]
        %v1483 = vld [vmem:[#allocation3 + $0x20] sm:$0xf]
        %v1484 = vld [vmem:[#allocation3 + $0x24] sm:$0xf]
        %v1485 = vld [vmem:[#allocation3 + $0x28] sm:$0xf]
        %v1486 = vld [vmem:[#allocation3 + $0x2c] sm:$0xf]
        %v1487 = vld [vmem:[#allocation3 + $0x30] sm:$0xf]
        %v1488 = vld [vmem:[#allocation3 + $0x34] sm:$0xf]
        %v1489 = vld [vmem:[#allocation3 + $0x38] sm:$0xf]
        %v1490 = vld [vmem:[#allocation3 + $0x3c] sm:$0xf]
        %v1491 = vld [vmem:[%s1] sm:$0xf]
        %v1492 = vld [vmem:[%s1 + $0x4] sm:$0xf]
        %v1493 = vld [vmem:[%s1 + $0x8] sm:$0xf]
        %v1494 = vld [vmem:[%s1 + $0xc] sm:$0xf]
        %v1495 = vld [vmem:[%s1 + $0x10] sm:$0xf]
        %v1496 = vld [vmem:[%s1 + $0x14] sm:$0xf]
        %v1497 = vld [vmem:[%s1 + $0x18] sm:$0xf]
        %v1498 = vld [vmem:[%s1 + $0x1c] sm:$0xf]
        %v1499 = vld [vmem:[%s1 + $0x20] sm:$0xf]
        %v1516 = vunpack.c.l.b16 %v1475
        %v1517 = vunpack.c.l.b16 %v1476
        %v1518 = vunpack.c.l.b16 %v1477
        %v1519 = vunpack.c.l.b16 %v1478
        %v1520 = vunpack.c.l.b16 %v1479
        %v1521 = vunpack.c.l.b16 %v1480
        %v1522 = vunpack.c.l.b16 %v1481
        %v1523 = vunpack.c.l.b16 %v1482
        %v1524 = vunpack.c.l.b16 %v1483
        %v1525 = vunpack.c.l.b16 %v1484
        %v1526 = vunpack.c.l.b16 %v1485
        %v1527 = vunpack.c.l.b16 %v1486
        %v1528 = vunpack.c.l.b16 %v1487
        %v1529 = vunpack.c.l.b16 %v1488
        %v1530 = vunpack.c.l.b16 %v1489
        %v1531 = vunpack.c.l.b16 %v1490
        %v1532 = vpack.c.b16 %v1517, %v1516
        %v1533 = vpack.c.b16 %v1519, %v1518
        %v1534 = vpack.c.b16 %v1521, %v1520
        %v1535 = vpack.c.b16 %v1523, %v1522
        %v1536 = vpack.c.b16 %v1525, %v1524
        %v1537 = vpack.c.b16 %v1527, %v1526
        %v1538 = vpack.c.b16 %v1529, %v1528
        %v1539 = vpack.c.b16 %v1531, %v1530
        %v1549 = vunpack.c.l.b16 %v1491
        %v1550 = vunpack.c.l.b16 %v1492
        %v1551 = vunpack.c.l.b16 %v1493
        %v1552 = vunpack.c.l.b16 %v1494
        %v1553 = vunpack.c.l.b16 %v1495
        %v1554 = vunpack.c.l.b16 %v1496
        %v1555 = vunpack.c.l.b16 %v1497
        %v1556 = vunpack.c.l.b16 %v1498
        %v1557 = vunpack.c.l.b16 %v1499
        %v1558 = vpack.c.b16 %v1550, %v1549
        %v1559 = vpack.c.b16 %v1552, %v1551
        %v1560 = vpack.c.b16 %v1554, %v1553
        %v1561 = vpack.c.b16 %v1556, %v1555
        %v1562 = vpack.c.b16 %v1557, %v1557
        %vm1567 = vcmask 588800
        %v1569 = vsel %vm1567, %v1532, 0
        %v1572 = vsel %vm1567, %v1533, 0
        %v1575 = vsel %vm1567, %v1534, 0
        %v1578 = vsel %vm1567, %v1535, 0
        %v1581 = vsel %vm1567, %v1536, 0
        %v1584 = vsel %vm1567, %v1537, 0
        %v1587 = vsel %vm1567, %v1538, 0
        %v1590 = vsel %vm1567, %v1539, 0
        %vm1592 = vcmask 1043456
        %v1594 = vsel %vm1592, %v1562, 0
        %1596 = vmatprep.subr.bf16.mxu0 0
        %1597 = vmatpush1.bf16.msra.mxu0 0
        %1598 = vmatprep.subr.bf16.mxu0 0
        %1599 = vmatpush1.bf16.msra.mxu0 0
        %1600 = vmatprep.subr.bf16.mxu0 0
        %1601 = vmatpush1.bf16.msra.mxu0 0
        %1602 = vmatprep.subr.bf16.mxu0 0
        %1603 = vmatpush1.bf16.msra.mxu0 %v1594
        %1604 = vmatprep.subr.bf16.mxu0 0
        %1605 = vmatpush1.bf16.msra.mxu0 %v1561
        %1606 = vmatprep.subr.bf16.mxu0 0
        %1607 = vmatpush1.bf16.msra.mxu0 %v1560
        %1608 = vmatprep.subr.bf16.mxu0 0
        %1609 = vmatpush1.bf16.msra.mxu0 %v1559
        %1610 = vmatprep.subr.bf16.mxu0 0
        %1611 = vmatpush1.bf16.msra.mxu0 %v1558
        %1612 = vmatprep.subr.bf16.mxu0 0
        %1613 = vmatpush2.bf16.msra.mxu0 0
        %1614 = vmatprep.subr.bf16.mxu0 0
        %1615 = vmatpush2.bf16.msra.mxu0 0
        %1616 = vmatprep.subr.bf16.mxu0 0
        %1617 = vmatpush2.bf16.msra.mxu0 0
        %1618 = vmatprep.subr.bf16.mxu0 0
        %1619 = vmatpush2.bf16.msra.mxu0 0
        %1620 = vmatprep.subr.bf16.mxu0 0
        %1621 = vmatpush2.bf16.msra.mxu0 0
        %1622 = vmatprep.subr.bf16.mxu0 0
        %1623 = vmatpush2.bf16.msra.mxu0 0
        %1624 = vmatprep.subr.bf16.mxu0 0
        %1625 = vmatpush2.bf16.msra.mxu0 0
        %1626 = vmatprep.subr.bf16.mxu0 0
        %1627 = vmatpush2.bf16.msra.mxu0 0
        %1628 = vmatprep.mubr.bf16.mxu0 0
        %1629 = vmatmul.mubr.bf16.gmra.mxu0 %v1569
        %v1630 = vpop.f32.mrf.mxu0
        %v1631 = vadd.f32 0.0, %v1630
        %v1632 = vpop.f32.mrf.mxu0
        %v1633 = vpop.f32.mrf.mxu0
        %v1634 = vadd.f32 0.0, %v1633
        %v1635 = vpop.f32.mrf.mxu0
        %1636 = vmatprep.mubr.bf16.mxu0 0
        %1637 = vmatmul.mubr.bf16.gmra.mxu0 %v1572
        %v1638 = vpop.f32.mrf.mxu0
        %v1639 = vadd.f32 0.0, %v1638
        %v1640 = vpop.f32.mrf.mxu0
        %v1641 = vpop.f32.mrf.mxu0
        %v1642 = vadd.f32 0.0, %v1641
        %v1643 = vpop.f32.mrf.mxu0
        %1644 = vmatprep.mubr.bf16.mxu0 0
        %1645 = vmatmul.mubr.bf16.gmra.mxu0 %v1575
        %v1646 = vpop.f32.mrf.mxu0
        %v1647 = vadd.f32 0.0, %v1646
        %v1648 = vpop.f32.mrf.mxu0
        %v1649 = vpop.f32.mrf.mxu0
        %v1650 = vadd.f32 0.0, %v1649
        %v1651 = vpop.f32.mrf.mxu0
        %1652 = vmatprep.mubr.bf16.mxu0 0
        %1653 = vmatmul.mubr.bf16.gmra.mxu0 %v1578
        %v1654 = vpop.f32.mrf.mxu0
        %v1655 = vadd.f32 0.0, %v1654
        %v1656 = vpop.f32.mrf.mxu0
        %v1657 = vpop.f32.mrf.mxu0
        %v1658 = vadd.f32 0.0, %v1657
        %v1659 = vpop.f32.mrf.mxu0
        %1660 = vmatprep.mubr.bf16.mxu0 0
        %1661 = vmatmul.mubr.bf16.gmra.mxu0 %v1581
        %v1662 = vpop.f32.mrf.mxu0
        %v1663 = vadd.f32 0.0, %v1662
        %v1664 = vpop.f32.mrf.mxu0
        %v1665 = vpop.f32.mrf.mxu0
        %v1666 = vadd.f32 0.0, %v1665
        %v1667 = vpop.f32.mrf.mxu0
        %1668 = vmatprep.mubr.bf16.mxu0 0
        %1669 = vmatmul.mubr.bf16.gmra.mxu0 %v1584
        %v1670 = vpop.f32.mrf.mxu0
        %v1671 = vadd.f32 0.0, %v1670
        %v1672 = vpop.f32.mrf.mxu0
        %v1673 = vpop.f32.mrf.mxu0
        %v1674 = vadd.f32 0.0, %v1673
        %v1675 = vpop.f32.mrf.mxu0
        %1676 = vmatprep.mubr.bf16.mxu0 0
        %1677 = vmatmul.mubr.bf16.gmra.mxu0 %v1587
        %v1678 = vpop.f32.mrf.mxu0
        %v1679 = vadd.f32 0.0, %v1678
        %v1680 = vpop.f32.mrf.mxu0
        %v1681 = vpop.f32.mrf.mxu0
        %v1682 = vadd.f32 0.0, %v1681
        %v1683 = vpop.f32.mrf.mxu0
        %1684 = vmatprep.mubr.bf16.mxu0 0
        %1685 = vmatmul.mubr.bf16.gmra.mxu0 %v1590
        %v1686 = vpop.f32.mrf.mxu0
        %v1687 = vadd.f32 0.0, %v1686
        %v1688 = vpop.f32.mrf.mxu0
        %v1689 = vpop.f32.mrf.mxu0
        %v1690 = vadd.f32 0.0, %v1689
        %v1691 = vpop.f32.mrf.mxu0
        %1692 = vdwg.mxu0
        %v1693 = vld [vmem:[%s2] sm:$0x1]
        %v1695 = vlaneseq
        %v1696 = vshrl.u32 %v1695, 7
        %v1697 = vsub.s32 0, %v1696
        %v1698 = vrot.slane %v1693, %v1697
        %v1700 = vmul.f32 %v1631, %v1698
        %v1701 = vmul.f32 %v1634, %v1698
        %v1702 = vmul.f32 %v1639, %v1698
        %v1703 = vmul.f32 %v1642, %v1698
        %v1704 = vmul.f32 %v1647, %v1698
        %v1705 = vmul.f32 %v1650, %v1698
        %v1706 = vmul.f32 %v1655, %v1698
        %v1707 = vmul.f32 %v1658, %v1698
        %v1708 = vmul.f32 %v1663, %v1698
        %v1709 = vmul.f32 %v1666, %v1698
        %v1710 = vmul.f32 %v1671, %v1698
        %v1711 = vmul.f32 %v1674, %v1698
        %v1712 = vmul.f32 %v1679, %v1698
        %v1713 = vmul.f32 %v1682, %v1698
        %v1714 = vmul.f32 %v1687, %v1698
        %v1715 = vmul.f32 %v1690, %v1698
        %v1716 = vld [vmem:[%s3] sm:$0x1]
        %v1718 = vlaneseq
        %v1719 = vshrl.u32 %v1718, 7
        %v1720 = vsub.s32 0, %v1719
        %v1721 = vrot.slane %v1716, %v1720
        %v1723 = vadd.f32 %v1700, %v1721
        %v1724 = vadd.f32 %v1701, %v1721
        %v1725 = vadd.f32 %v1702, %v1721
        %v1726 = vadd.f32 %v1703, %v1721
        %v1727 = vadd.f32 %v1704, %v1721
        %v1728 = vadd.f32 %v1705, %v1721
        %v1729 = vadd.f32 %v1706, %v1721
        %v1730 = vadd.f32 %v1707, %v1721
        %v1731 = vadd.f32 %v1708, %v1721
        %v1732 = vadd.f32 %v1709, %v1721
        %v1733 = vadd.f32 %v1710, %v1721
        %v1734 = vadd.f32 %v1711, %v1721
        %v1735 = vadd.f32 %v1712, %v1721
        %v1736 = vadd.f32 %v1713, %v1721
        %v1737 = vadd.f32 %v1714, %v1721
        %v1738 = vadd.f32 %v1715, %v1721
        %v1739 = vmax.f32 %v1723, 0.0
        %v1740 = vmax.f32 %v1724, 0.0
        %v1741 = vmax.f32 %v1725, 0.0
        %v1742 = vmax.f32 %v1726, 0.0
        %v1743 = vmax.f32 %v1727, 0.0
        %v1744 = vmax.f32 %v1728, 0.0
        %v1745 = vmax.f32 %v1729, 0.0
        %v1746 = vmax.f32 %v1730, 0.0
        %v1747 = vmax.f32 %v1731, 0.0
        %v1748 = vmax.f32 %v1732, 0.0
        %v1749 = vmax.f32 %v1733, 0.0
        %v1750 = vmax.f32 %v1734, 0.0
        %v1751 = vmax.f32 %v1735, 0.0
        %v1752 = vmax.f32 %v1736, 0.0
        %v1753 = vmax.f32 %v1737, 0.0
        %v1754 = vmax.f32 %v1738, 0.0
        %1755 = vst [vmem:[%s204] sm:$0xff] %v1739
        %1756 = vst [vmem:[%s204 + $0x8] sm:$0xff] %v1740
        %1757 = vst [vmem:[%s204 + $0x10] sm:$0xff] %v1741
        %1758 = vst [vmem:[%s204 + $0x18] sm:$0xff] %v1742
        %1759 = vst [vmem:[%s204 + $0x20] sm:$0xff] %v1743
        %1760 = vst [vmem:[%s204 + $0x28] sm:$0xff] %v1744
        %1761 = vst [vmem:[%s204 + $0x30] sm:$0xff] %v1745
        %1762 = vst [vmem:[%s204 + $0x38] sm:$0xff] %v1746
        %1763 = vst [vmem:[%s204 + $0x40] sm:$0xff] %v1747
        %1764 = vst [vmem:[%s204 + $0x48] sm:$0xff] %v1748
        %1765 = vst [vmem:[%s204 + $0x50] sm:$0xff] %v1749
        %1766 = vst [vmem:[%s204 + $0x58] sm:$0xff] %v1750
        %1767 = vst [vmem:[%s204 + $0x60] sm:$0xff] %v1751
        %1768 = vst [vmem:[%s204 + $0x68] sm:$0xff] %v1752
        %1769 = vst [vmem:[%s204 + $0x70] sm:$0xff] %v1753
        %1770 = vst [vmem:[%s204 + $0x78] sm:$0xff] %v1754
        %s1771 = sand.u32 %s129, 1
        %s1772 = scalar_lea.sflag [#allocation5], %s1771
        %s1773 = sand.u32 %s129, 1
        %s1774 = smul.addr %s1773, 128
        %s1775 = scalar_lea.vmem [#allocation4], %s1774
        // Predicated region
        $region41: #{tpu_custom_call.1} parent=35 // pred_check
          %p1776 = pneg %p139
        $region42: #{tpu_custom_call.1} parent=35 // pred_check_branch
          %1778 = sbr.rel (%p1776) target = $region44
        $region43: #{tpu_custom_call.1} parent=35 // pred_region
          %s1779 = smul.u32 8, %s23
          %s1781 = ssub.s32 2048, 2048
          %1782 = vsyncadd %s1772, %s1781
          %s1783 = smul.addr %s1779, 2
          %s1784 = smul.addr %s22, 32
          %s1785 = sadd.s32 %s1783, %s1784
          %s1786 = smul.addr %s1785, 128
          %s1787 = scalar_lea.hbm %s4, %s1786
          %s1788 = sshll.u32 %s1775, 4
          %s1789 = int_to_ptr.vmem [resolvable:$true] %s1788
          %1794 = dma.vmem_to_hbm [thread:$0]  %s1789, 2048, %s1787, %s1772, 128, 128, 8
        $region44: #{tpu_custom_call.1} parent=35 // pred_fallthru
          _
      $region36: #{tpu_custom_call.1} parent=5 // pred_fallthru
        _
      %p1795 = scmp.le.s32.totalorder 2, %s13
      // Predicated region
      $region45: #{tpu_custom_call.1} parent=5 // pred_check
        %p1796 = pneg %p1795
      $region46: #{tpu_custom_call.1} parent=5 // pred_check_branch
        %1798 = sbr.rel (%p1796) target = $region48
      $region47: #{tpu_custom_call.1} parent=5 // pred_region
        %s1799 = ssub.s32 %s13, 2
        // Predicated region
        $region49: #{tpu_custom_call.1} parent=47 // pred_check
          %p1800 = pneg %p145
        $region50: #{tpu_custom_call.1} parent=47 // pred_check_branch
          %1802 = sbr.rel (%p1800) target = $region52
        $region51: #{tpu_custom_call.1} parent=47 // pred_region
          %s1803 = sand.u32 %s130, 1
          %s1804 = scalar_lea.sflag [#allocation5], %s1803
          %s1805 = sand.u32 %s130, 1
          %s1806 = smul.addr %s1805, 128
          %s1807 = scalar_lea.vmem [#allocation4], %s1806
          %1808 = dma.done %s1804, 2048
        $region52: #{tpu_custom_call.1} parent=47 // pred_fallthru
          _
      $region48: #{tpu_custom_call.1} parent=5 // pred_fallthru
        _
    $region6: #{tpu_custom_call.1} parent=1 // loop_footer
      %s17 = sadd.s32 1, %s13
    $region7: #{tpu_custom_call.1} parent=1 // loop_footer_branch
      %12 = sbr.rel target = $region3
    $region8: #{tpu_custom_call.1} parent=1 // loop_exit
      _
    %1809 = vsyncpa [#allocation5], 1
    %s1810 = scalar_lea.sflag [#allocation5], 1
    %1811 = vsyncpa %s1810, 1

</llo_original>
